<compile_context>
chip_gen: v6e
topology: v6e:2x2x1
jax: 0.10.0
libtpu: 0.0.40
codegen_flags: <defaults>
</compile_context>

<pallas_src>
import functools

import jax
import jax.numpy as jnp
from jax.experimental import pallas as pl
from jax.experimental.pallas import tpu as pltpu


def _round_up(x, m):
    return (x + m - 1) // m * m


def _pad_to(a, shape):
    pads = [(0, t - s) for s, t in zip(a.shape, shape)]
    return jnp.pad(a, pads)


def _mlp_head_kernel(x_ref, w0_ref, w1_ref, w2_ref, w3_ref, w4_ref, w5_ref,
                     b5_ref, out_ref):
    """One batch tile (TM rows) through the whole 6-layer MLP.

    Weights/bias are full (constant-index) blocks and stay VMEM-resident across
    the batch grid. bf16 operands, f32 MXU accumulation, f32 output.
    """

    def linear_relu(h, w_ref):
        z = jnp.dot(h, w_ref[...], preferred_element_type=jnp.float32)
        return jnp.maximum(z, 0.0).astype(jnp.bfloat16)

    h = x_ref[...]                      # (TM, 512) bf16, cast/padded in wrapper
    h = linear_relu(h, w0_ref)          # (TM, 512)
    h = linear_relu(h, w1_ref)          # (TM, 256)
    h = linear_relu(h, w2_ref)          # (TM, 128)
    h = linear_relu(h, w3_ref)          # (TM, 256)
    h = linear_relu(h, w4_ref)          # (TM, 512)
    y = jnp.dot(h, w5_ref[...], preferred_element_type=jnp.float32)
    # (1, 512) f32 bias broadcasts over the TM sublane rows on the VPU.
    out_ref[...] = (y + b5_ref[...]).astype(out_ref.dtype)


def prepare_params(weights, bias):
    """Pad every weight dim up to a multiple of 128 (400 -> 512), cast to bf16.

    Zero padding preserves the math exactly; extra output lanes stay 0 through
    the ReLU chain and are sliced off after the kernel.
    """
    padded_w = []
    for w in weights:
        tgt = tuple(_round_up(d, 128) for d in w.shape)
        padded_w.append(_pad_to(w, tgt).astype(jnp.bfloat16))
    b_tgt = (1, _round_up(bias.shape[1], 128))
    padded_b = _pad_to(bias, b_tgt).astype(jnp.float32)
    return padded_w, padded_b


def mlp_head_forward(target_points, padded_weights, padded_bias, num_points,
                     *, block_m=128):
    """target_points: (B, num_points, 2) -> pred_points: (B, num_points, 2)."""
    B = target_points.shape[0]
    feat = num_points * 2
    in_pad = padded_weights[0].shape[0]      # 512
    out_pad = padded_weights[-1].shape[1]    # 512

    x = target_points.astype(jnp.float32).reshape(B, feat)

    # Batch tile: at least one sublane tile (8 rows), at most block_m rows.
    tm = min(block_m, _round_up(max(B, 8), 8))
    padded_batch = _round_up(max(B, tm), tm)

    x_p = jnp.pad(x, ((0, padded_batch - B), (0, in_pad - feat))).astype(jnp.bfloat16)

    grid = (padded_batch // tm,)

    x_spec = pl.BlockSpec((tm, in_pad), lambda i: (i, 0))
    w_specs = [pl.BlockSpec(w.shape, lambda i: (0, 0)) for w in padded_weights]
    b_spec = pl.BlockSpec(padded_bias.shape, lambda i: (0, 0))
    out_spec = pl.BlockSpec((tm, out_pad), lambda i: (i, 0))

    flops = 2 * padded_batch * sum(w.shape[0] * w.shape[1] for w in padded_weights)
    bytes_accessed = (x_p.size * 2
                      + sum(w.size * 2 for w in padded_weights)
                      + padded_bias.size * 4
                      + padded_batch * out_pad * 4)

    y = pl.pallas_call(
        _mlp_head_kernel,
        out_shape=jax.ShapeDtypeStruct((padded_batch, out_pad), jnp.float32),
        grid=grid,
        in_specs=[x_spec] + w_specs + [b_spec],
        out_specs=out_spec,
        compiler_params=pltpu.CompilerParams(
            dimension_semantics=("parallel",)),
        cost_estimate=pl.CostEstimate(
            flops=flops, transcendentals=0, bytes_accessed=bytes_accessed),
    )(x_p, *padded_weights, padded_bias)

    return y[:B, :feat].reshape(B, num_points, 2)


def make_params(key, num_points):
    """Deterministic params mirroring MLPHead.make_fc_layers + init_weights.

    fc_cfg = [400, 256, 128, 256, 400], input_channels = 400,
    output_channels = num_points * 2. Weights ~ U(-0.2, 0.2), final bias = 0.
    Stored as (in, out) so the kernel does x @ W.
    """
    input_channels = 400
    fc_cfg = [400, 256, 128, 256, 400]
    output_channels = num_points * 2

    dims = [input_channels] + fc_cfg + [output_channels]
    weights = []
    for i in range(len(dims) - 1):
        key, sub = jax.random.split(key)
        w = jax.random.uniform(sub, (dims[i], dims[i + 1]),
                               dtype=jnp.float32, minval=-0.2, maxval=0.2)
        weights.append(w)
    bias = jnp.zeros((1, output_channels), dtype=jnp.float32)
    return weights, bias


def reference_forward(target_points, weights, bias, num_points):
    """Pure-JAX reference mirroring the kernel math (bf16 operands, f32 acc)."""
    B = target_points.shape[0]
    h = target_points.astype(jnp.float32).reshape(B, -1).astype(jnp.bfloat16)
    for w in weights[:-1]:
        z = jnp.dot(h, w.astype(jnp.bfloat16),
                    preferred_element_type=jnp.float32)
        h = jnp.maximum(z, 0.0).astype(jnp.bfloat16)
    y = jnp.dot(h, weights[-1].astype(jnp.bfloat16),
                preferred_element_type=jnp.float32) + bias
    return y.reshape(B, num_points, 2)


if __name__ == "__main__":
    key = jax.random.PRNGKey(0)
    num_points = 200          # -> input/output feature dim = 400 (matches fc_cfg)
    batch_size = 2

    key, pkey, xkey = jax.random.split(key, 3)
    weights, bias = make_params(pkey, num_points)
    padded_weights, padded_bias = prepare_params(weights, bias)
    target_points = jax.random.normal(
        xkey, (batch_size, num_points, 2), dtype=jnp.float32)

    fwd = jax.jit(functools.partial(mlp_head_forward, num_points=num_points))
    pred_points = fwd(target_points, padded_weights, padded_bias)
    jax.block_until_ready(pred_points)

    ref = reference_forward(target_points, weights, bias, num_points)
    assert pred_points.shape == (batch_size, num_points, 2)
    max_err = float(jnp.max(jnp.abs(pred_points - ref)))
    assert jnp.allclose(pred_points, ref, atol=1e-2, rtol=1e-2), max_err

    # TODO(synk): build_losses / get_loss depend on an external loss_utils
    # registry and are training-only; not part of the forward kernel.
    print("KERNEL_OK")
</pallas_src>

<mosaic_0001>
module attributes {stable_mosaic.version = 11 : i64} {
  func.func @_mlp_head_kernel(%arg0: i32, %arg1: memref<8x512xbf16, #tpu.memory_space<vmem>>, %arg2: memref<512x512xbf16, #tpu.memory_space<vmem>>, %arg3: memref<512x256xbf16, #tpu.memory_space<vmem>>, %arg4: memref<256x128xbf16, #tpu.memory_space<vmem>>, %arg5: memref<128x256xbf16, #tpu.memory_space<vmem>>, %arg6: memref<256x512xbf16, #tpu.memory_space<vmem>>, %arg7: memref<512x512xbf16, #tpu.memory_space<vmem>>, %arg8: memref<1x512xf32, #tpu.memory_space<vmem>>, %arg9: memref<8x512xf32, #tpu.memory_space<vmem>>) attributes {dimension_semantics = [#tpu.dimension_semantics<parallel>], iteration_bounds = array<i64: 1>, scalar_prefetch = 0 : i64, scratch_operands = 0 : i64, tpu.core_type = #tpu.core_type<tc>, window_params = [{transform_indices = @transform_0, window_bounds = array<i64: 8, 512>}, {pipeline_mode = #tpu.pipeline_mode<synchronous>, transform_indices = @transform_1, window_bounds = array<i64: 512, 512>}, {pipeline_mode = #tpu.pipeline_mode<synchronous>, transform_indices = @transform_2, window_bounds = array<i64: 512, 256>}, {pipeline_mode = #tpu.pipeline_mode<synchronous>, transform_indices = @transform_3, window_bounds = array<i64: 256, 128>}, {pipeline_mode = #tpu.pipeline_mode<synchronous>, transform_indices = @transform_4, window_bounds = array<i64: 128, 256>}, {pipeline_mode = #tpu.pipeline_mode<synchronous>, transform_indices = @transform_5, window_bounds = array<i64: 256, 512>}, {pipeline_mode = #tpu.pipeline_mode<synchronous>, transform_indices = @transform_6, window_bounds = array<i64: 512, 512>}, {pipeline_mode = #tpu.pipeline_mode<synchronous>, transform_indices = @transform_7, window_bounds = array<i64: 1, 512>}, {transform_indices = @transform_8, window_bounds = array<i64: 8, 512>}]} {
    %c0 = arith.constant 0 : index
    %c0_0 = arith.constant 0 : index
    %0 = vector.load %arg1[%c0, %c0_0] : memref<8x512xbf16, #tpu.memory_space<vmem>>, vector<8x512xbf16>
    %c0_1 = arith.constant 0 : index
    %c0_2 = arith.constant 0 : index
    %1 = vector.load %arg2[%c0_1, %c0_2] : memref<512x512xbf16, #tpu.memory_space<vmem>>, vector<512x512xbf16>
    %cst = arith.constant dense<0.000000e+00> : vector<8x512xf32>
    %2 = tpu.matmul %0, %1, %cst {dimension_numbers = #tpu.dot_dimension_numbers<[1], [0], [0], [1], [0, 0, 1, 1], [], []>} : vector<8x512xbf16>, vector<512x512xbf16>, vector<8x512xf32> -> vector<8x512xf32>
    %cst_3 = arith.constant 0.000000e+00 : f32
    %3 = vector.broadcast %cst_3 : f32 to vector<8x512xf32>
    %4 = arith.maximumf %2, %3 : vector<8x512xf32>
    %5 = arith.truncf %4 : vector<8x512xf32> to vector<8x512xbf16>
    %c0_4 = arith.constant 0 : index
    %c0_5 = arith.constant 0 : index
    %6 = vector.load %arg3[%c0_4, %c0_5] : memref<512x256xbf16, #tpu.memory_space<vmem>>, vector<512x256xbf16>
    %cst_6 = arith.constant dense<0.000000e+00> : vector<8x256xf32>
    %7 = tpu.matmul %5, %6, %cst_6 {dimension_numbers = #tpu.dot_dimension_numbers<[1], [0], [0], [1], [0, 0, 1, 1], [], []>} : vector<8x512xbf16>, vector<512x256xbf16>, vector<8x256xf32> -> vector<8x256xf32>
    %cst_7 = arith.constant 0.000000e+00 : f32
    %8 = vector.broadcast %cst_7 : f32 to vector<8x256xf32>
    %9 = arith.maximumf %7, %8 : vector<8x256xf32>
    %10 = arith.truncf %9 : vector<8x256xf32> to vector<8x256xbf16>
    %c0_8 = arith.constant 0 : index
    %c0_9 = arith.constant 0 : index
    %11 = vector.load %arg4[%c0_8, %c0_9] : memref<256x128xbf16, #tpu.memory_space<vmem>>, vector<256x128xbf16>
    %cst_10 = arith.constant dense<0.000000e+00> : vector<8x128xf32>
    %12 = tpu.matmul %10, %11, %cst_10 {dimension_numbers = #tpu.dot_dimension_numbers<[1], [0], [0], [1], [0, 0, 1, 1], [], []>} : vector<8x256xbf16>, vector<256x128xbf16>, vector<8x128xf32> -> vector<8x128xf32>
    %cst_11 = arith.constant 0.000000e+00 : f32
    %13 = vector.broadcast %cst_11 : f32 to vector<8x128xf32>
    %14 = arith.maximumf %12, %13 : vector<8x128xf32>
    %15 = arith.truncf %14 : vector<8x128xf32> to vector<8x128xbf16>
    %c0_12 = arith.constant 0 : index
    %c0_13 = arith.constant 0 : index
    %16 = vector.load %arg5[%c0_12, %c0_13] : memref<128x256xbf16, #tpu.memory_space<vmem>>, vector<128x256xbf16>
    %cst_14 = arith.constant dense<0.000000e+00> : vector<8x256xf32>
    %17 = tpu.matmul %15, %16, %cst_14 {dimension_numbers = #tpu.dot_dimension_numbers<[1], [0], [0], [1], [0, 0, 1, 1], [], []>} : vector<8x128xbf16>, vector<128x256xbf16>, vector<8x256xf32> -> vector<8x256xf32>
    %cst_15 = arith.constant 0.000000e+00 : f32
    %18 = vector.broadcast %cst_15 : f32 to vector<8x256xf32>
    %19 = arith.maximumf %17, %18 : vector<8x256xf32>
    %20 = arith.truncf %19 : vector<8x256xf32> to vector<8x256xbf16>
    %c0_16 = arith.constant 0 : index
    %c0_17 = arith.constant 0 : index
    %21 = vector.load %arg6[%c0_16, %c0_17] : memref<256x512xbf16, #tpu.memory_space<vmem>>, vector<256x512xbf16>
    %cst_18 = arith.constant dense<0.000000e+00> : vector<8x512xf32>
    %22 = tpu.matmul %20, %21, %cst_18 {dimension_numbers = #tpu.dot_dimension_numbers<[1], [0], [0], [1], [0, 0, 1, 1], [], []>} : vector<8x256xbf16>, vector<256x512xbf16>, vector<8x512xf32> -> vector<8x512xf32>
    %cst_19 = arith.constant 0.000000e+00 : f32
    %23 = vector.broadcast %cst_19 : f32 to vector<8x512xf32>
    %24 = arith.maximumf %22, %23 : vector<8x512xf32>
    %25 = arith.truncf %24 : vector<8x512xf32> to vector<8x512xbf16>
    %c0_20 = arith.constant 0 : index
    %c0_21 = arith.constant 0 : index
    %26 = vector.load %arg7[%c0_20, %c0_21] : memref<512x512xbf16, #tpu.memory_space<vmem>>, vector<512x512xbf16>
    %cst_22 = arith.constant dense<0.000000e+00> : vector<8x512xf32>
    %27 = tpu.matmul %25, %26, %cst_22 {dimension_numbers = #tpu.dot_dimension_numbers<[1], [0], [0], [1], [0, 0, 1, 1], [], []>} : vector<8x512xbf16>, vector<512x512xbf16>, vector<8x512xf32> -> vector<8x512xf32>
    %c0_23 = arith.constant 0 : index
    %c0_24 = arith.constant 0 : index
    %28 = vector.load %arg8[%c0_23, %c0_24] : memref<1x512xf32, #tpu.memory_space<vmem>>, vector<1x512xf32>
    %29 = vector.broadcast %28 : vector<1x512xf32> to vector<8x512xf32>
    %30 = arith.addf %27, %29 : vector<8x512xf32>
    %c0_25 = arith.constant 0 : index
    %c0_26 = arith.constant 0 : index
    %31 = vector.load %arg9[%c0_25, %c0_26] : memref<8x512xf32, #tpu.memory_space<vmem>>, vector<8x512xf32>
    tpu.vector_store %arg9[%c0_25, %c0_26], %30 {strides = array<i32>} : memref<8x512xf32, #tpu.memory_space<vmem>>, vector<8x512xf32>,
    return
  }
  func.func @transform_0(%arg0: i32) -> (i32, i32) {
    %c0_i32 = arith.constant 0 : i32
    %c0_i32_0 = arith.constant 0 : i32
    return %arg0, %c0_i32 : i32, i32
  }
  func.func @transform_1(%arg0: i32) -> (i32, i32) {
    %c0_i32 = arith.constant 0 : i32
    %c0_i32_0 = arith.constant 0 : i32
    %c0_i32_1 = arith.constant 0 : i32
    return %c0_i32, %c0_i32_0 : i32, i32
  }
  func.func @transform_2(%arg0: i32) -> (i32, i32) {
    %c0_i32 = arith.constant 0 : i32
    %c0_i32_0 = arith.constant 0 : i32
    %c0_i32_1 = arith.constant 0 : i32
    return %c0_i32, %c0_i32_0 : i32, i32
  }
  func.func @transform_3(%arg0: i32) -> (i32, i32) {
    %c0_i32 = arith.constant 0 : i32
    %c0_i32_0 = arith.constant 0 : i32
    %c0_i32_1 = arith.constant 0 : i32
    return %c0_i32, %c0_i32_0 : i32, i32
  }
  func.func @transform_4(%arg0: i32) -> (i32, i32) {
    %c0_i32 = arith.constant 0 : i32
    %c0_i32_0 = arith.constant 0 : i32
    %c0_i32_1 = arith.constant 0 : i32
    return %c0_i32, %c0_i32_0 : i32, i32
  }
  func.func @transform_5(%arg0: i32) -> (i32, i32) {
    %c0_i32 = arith.constant 0 : i32
    %c0_i32_0 = arith.constant 0 : i32
    %c0_i32_1 = arith.constant 0 : i32
    return %c0_i32, %c0_i32_0 : i32, i32
  }
  func.func @transform_6(%arg0: i32) -> (i32, i32) {
    %c0_i32 = arith.constant 0 : i32
    %c0_i32_0 = arith.constant 0 : i32
    %c0_i32_1 = arith.constant 0 : i32
    return %c0_i32, %c0_i32_0 : i32, i32
  }
  func.func @transform_7(%arg0: i32) -> (i32, i32) {
    %c0_i32 = arith.constant 0 : i32
    %c0_i32_0 = arith.constant 0 : i32
    %c0_i32_1 = arith.constant 0 : i32
    return %c0_i32, %c0_i32_0 : i32, i32
  }
  func.func @transform_8(%arg0: i32) -> (i32, i32) {
    %c0_i32 = arith.constant 0 : i32
    %c0_i32_0 = arith.constant 0 : i32
    return %arg0, %c0_i32 : i32, i32
  }
}

</mosaic_0001>

<llo_original>
// kernel: mlp_head_forward.1
$region0: #{mlp_head_forward.1}
  #allocation0 [shape = 'u32[]', space=smem, size = 0x4, offset = 0x4, fixed_abs, tag = 'smem constant byte address 0x4 - core index']
  #allocation1 [shape = 'u32[144,128]{1,0:T(1,128)}', space=vmem, size = 0x12000, scoped, tag = 'internal scratch']
  %s0 = inlined_call_operand.vmem [shape: bf16[8,512], index: 0, kind: input, shape index: {}]
  %s1 = inlined_call_operand.hbm [shape: bf16[512,512], index: 1, kind: input, shape index: {}]
  %s2 = inlined_call_operand.hbm [shape: bf16[512,256], index: 2, kind: input, shape index: {}]
  %s3 = inlined_call_operand.vmem [shape: bf16[256,128], index: 3, kind: input, shape index: {}]
  %s4 = inlined_call_operand.vmem [shape: bf16[128,256], index: 4, kind: input, shape index: {}]
  %s5 = inlined_call_operand.hbm [shape: bf16[256,512], index: 5, kind: input, shape index: {}]
  %s6 = inlined_call_operand.hbm [shape: bf16[512,512], index: 6, kind: input, shape index: {}]
  %s7 = inlined_call_operand.vmem [shape: f32[1,512], index: 7, kind: input, shape index: {}]
  %s8 = inlined_call_operand.vmem [shape: f32[8,512], index: 8, kind: output, shape index: {}]
  %s9 = sld [smem:[#allocation0]]
  $region58: #{mlp_head_forward.1} parent=0
    _
  %s11 = ssub.s32 1, %s9
  %s12 = scalar_select 0, %s11, %s9
  $region1: #{mlp_head_forward.1} parent=0
    #allocation2 [shape = 'u8[524288]{0}', space=vmem, size = 0x80000, scoped, tag = 'input window, operand 1, single buffered']
    #allocation3 [shape = 's32[1]{0}', space=sflag, size = 0x4, scoped, tag = 'scoped memory for mlp_head_forward.1']
    #allocation4 [shape = 'u8[262144]{0}', space=vmem, size = 0x40000, scoped, tag = 'input window, operand 2, single buffered']
    #allocation5 [shape = 's32[1]{0}', space=sflag, size = 0x4, scoped, tag = 'scoped memory for mlp_head_forward.1']
    #allocation6 [shape = 'u8[262144]{0}', space=vmem, size = 0x40000, scoped, tag = 'input window, operand 5, single buffered']
    #allocation7 [shape = 'u8[524288]{0}', space=vmem, size = 0x80000, scoped, tag = 'input window, operand 6, single buffered']
    #allocation8 [shape = 's32[1]{0}', space=sflag, size = 0x4, scoped, tag = 'scoped memory for mlp_head_forward.1']
    %13 = vsyncpa [#allocation3], 0
    %14 = vsyncpa [#allocation5], 0
    %15 = vsyncpa [#allocation8], 0
    // Predicated region
    $region2: #{mlp_head_forward.1} parent=1 // pred_check
      _
    $region3: #{mlp_head_forward.1} parent=1 // pred_check_branch
      %17 = sbr.rel (0) target = $region5
    $region4: #{mlp_head_forward.1} parent=1 // pred_region
      _
    $region5: #{mlp_head_forward.1} parent=1 // pred_fallthru
      _
    // Predicated region
    $region6: #{mlp_head_forward.1} parent=1 // pred_check
      _
    $region7: #{mlp_head_forward.1} parent=1 // pred_check_branch
      %19 = sbr.rel (0) target = $region9
    $region8: #{mlp_head_forward.1} parent=1 // pred_region
      %s21 = ssub.s32 16384, 16384
      %22 = vsyncadd [#allocation3], %s21
      %s23 = sshll.u32 [#allocation2], 4
      %s24 = int_to_ptr.vmem [resolvable:$true] %s23
      %29 = dma.hbm_to_vmem [thread:$0]  %s1, 16384, %s24, [#allocation3], 256, 256, 16
    $region9: #{mlp_head_forward.1} parent=1 // pred_fallthru
      _
    // Predicated region
    $region10: #{mlp_head_forward.1} parent=1 // pred_check
      _
    $region11: #{mlp_head_forward.1} parent=1 // pred_check_branch
      %31 = sbr.rel (0) target = $region13
    $region12: #{mlp_head_forward.1} parent=1 // pred_region
      %s33 = ssub.s32 8192, 8192
      %34 = vsyncadd [#allocation5], %s33
      %s35 = sshll.u32 [#allocation4], 4
      %s36 = int_to_ptr.vmem [resolvable:$true] %s35
      %41 = dma.hbm_to_vmem [thread:$0]  %s2, 8192, %s36, [#allocation5], 128, 128, 8
    $region13: #{mlp_head_forward.1} parent=1 // pred_fallthru
      _
    // Predicated region
    $region14: #{mlp_head_forward.1} parent=1 // pred_check
      _
    $region15: #{mlp_head_forward.1} parent=1 // pred_check_branch
      %43 = sbr.rel (0) target = $region17
    $region16: #{mlp_head_forward.1} parent=1 // pred_region
      _
    $region17: #{mlp_head_forward.1} parent=1 // pred_fallthru
      _
    // Predicated region
    $region18: #{mlp_head_forward.1} parent=1 // pred_check
      _
    $region19: #{mlp_head_forward.1} parent=1 // pred_check_branch
      %45 = sbr.rel (0) target = $region21
    $region20: #{mlp_head_forward.1} parent=1 // pred_region
      _
    $region21: #{mlp_head_forward.1} parent=1 // pred_fallthru
      _
    // Predicated region
    $region22: #{mlp_head_forward.1} parent=1 // pred_check
      _
    $region23: #{mlp_head_forward.1} parent=1 // pred_check_branch
      %47 = sbr.rel (0) target = $region25
    $region24: #{mlp_head_forward.1} parent=1 // pred_region
      %s49 = ssub.s32 8192, 8192
      %50 = vsyncadd [#allocation5], %s49
      %s51 = sshll.u32 [#allocation6], 4
      %s52 = int_to_ptr.vmem [resolvable:$true] %s51
      %57 = dma.hbm_to_vmem [thread:$0]  %s5, 8192, %s52, [#allocation5], 256, 256, 16
    $region25: #{mlp_head_forward.1} parent=1 // pred_fallthru
      _
    // Predicated region
    $region26: #{mlp_head_forward.1} parent=1 // pred_check
      _
    $region27: #{mlp_head_forward.1} parent=1 // pred_check_branch
      %59 = sbr.rel (0) target = $region29
    $region28: #{mlp_head_forward.1} parent=1 // pred_region
      %s61 = ssub.s32 16384, 16384
      %62 = vsyncadd [#allocation8], %s61
      %s63 = sshll.u32 [#allocation7], 4
      %s64 = int_to_ptr.vmem [resolvable:$true] %s63
      %69 = dma.hbm_to_vmem [thread:$0]  %s6, 16384, %s64, [#allocation8], 256, 256, 16
    $region29: #{mlp_head_forward.1} parent=1 // pred_fallthru
      _
    // Predicated region
    $region30: #{mlp_head_forward.1} parent=1 // pred_check
      _
    $region31: #{mlp_head_forward.1} parent=1 // pred_check_branch
      %71 = sbr.rel (0) target = $region33
    $region32: #{mlp_head_forward.1} parent=1 // pred_region
      _
    $region33: #{mlp_head_forward.1} parent=1 // pred_fallthru
      _
    // Predicated region
    $region34: #{mlp_head_forward.1} parent=1 // pred_check
      _
    $region35: #{mlp_head_forward.1} parent=1 // pred_check_branch
      %73 = sbr.rel (0) target = $region37
    $region36: #{mlp_head_forward.1} parent=1 // pred_region
      %74 = dma.done [#allocation3], 16384
    $region37: #{mlp_head_forward.1} parent=1 // pred_fallthru
      _
    // Predicated region
    $region38: #{mlp_head_forward.1} parent=1 // pred_check
      _
    $region39: #{mlp_head_forward.1} parent=1 // pred_check_branch
      %76 = sbr.rel (0) target = $region41
    $region40: #{mlp_head_forward.1} parent=1 // pred_region
      %77 = dma.done [#allocation5], 8192
    $region41: #{mlp_head_forward.1} parent=1 // pred_fallthru
      _
    // Predicated region
    $region42: #{mlp_head_forward.1} parent=1 // pred_check
      _
    $region43: #{mlp_head_forward.1} parent=1 // pred_check_branch
      %79 = sbr.rel (0) target = $region45
    $region44: #{mlp_head_forward.1} parent=1 // pred_region
      %80 = dma.done [#allocation5], 8192
    $region45: #{mlp_head_forward.1} parent=1 // pred_fallthru
      _
    // Predicated region
    $region46: #{mlp_head_forward.1} parent=1 // pred_check
      _
    $region47: #{mlp_head_forward.1} parent=1 // pred_check_branch
      %82 = sbr.rel (0) target = $region49
    $region48: #{mlp_head_forward.1} parent=1 // pred_region
      %83 = dma.done [#allocation8], 16384
    $region49: #{mlp_head_forward.1} parent=1 // pred_fallthru
      _
    %v85 = vld [vmem:[%s0] sm:$0xff]
    %v86 = vld [vmem:[%s0 + $0x8] sm:$0xff]
    %v87 = vld [vmem:[#allocation2] sm:$0xff]
    %v88 = vld [vmem:[#allocation2 + $0x8] sm:$0xff]
    %v89 = vld [vmem:[#allocation2 + $0x10] sm:$0xff]
    %v90 = vld [vmem:[#allocation2 + $0x18] sm:$0xff]
    %v91 = vld [vmem:[#allocation2 + $0x20] sm:$0xff]
    %v92 = vld [vmem:[#allocation2 + $0x28] sm:$0xff]
    %v93 = vld [vmem:[#allocation2 + $0x30] sm:$0xff]
    %v94 = vld [vmem:[#allocation2 + $0x38] sm:$0xff]
    %v95 = vld [vmem:[#allocation2 + $0x40] sm:$0xff]
    %v96 = vld [vmem:[#allocation2 + $0x48] sm:$0xff]
    %v97 = vld [vmem:[#allocation2 + $0x50] sm:$0xff]
    %v98 = vld [vmem:[#allocation2 + $0x58] sm:$0xff]
    %v99 = vld [vmem:[#allocation2 + $0x60] sm:$0xff]
    %v100 = vld [vmem:[#allocation2 + $0x68] sm:$0xff]
    %v101 = vld [vmem:[#allocation2 + $0x70] sm:$0xff]
    %v102 = vld [vmem:[#allocation2 + $0x78] sm:$0xff]
    %v103 = vld [vmem:[#allocation2 + $0x80] sm:$0xff]
    %v104 = vld [vmem:[#allocation2 + $0x88] sm:$0xff]
    %v105 = vld [vmem:[#allocation2 + $0x90] sm:$0xff]
    %v106 = vld [vmem:[#allocation2 + $0x98] sm:$0xff]
    %v107 = vld [vmem:[#allocation2 + $0xa0] sm:$0xff]
    %v108 = vld [vmem:[#allocation2 + $0xa8] sm:$0xff]
    %v109 = vld [vmem:[#allocation2 + $0xb0] sm:$0xff]
    %v110 = vld [vmem:[#allocation2 + $0xb8] sm:$0xff]
    %v111 = vld [vmem:[#allocation2 + $0xc0] sm:$0xff]
    %v112 = vld [vmem:[#allocation2 + $0xc8] sm:$0xff]
    %v113 = vld [vmem:[#allocation2 + $0xd0] sm:$0xff]
    %v114 = vld [vmem:[#allocation2 + $0xd8] sm:$0xff]
    %v115 = vld [vmem:[#allocation2 + $0xe0] sm:$0xff]
    %v116 = vld [vmem:[#allocation2 + $0xe8] sm:$0xff]
    %v117 = vld [vmem:[#allocation2 + $0xf0] sm:$0xff]
    %v118 = vld [vmem:[#allocation2 + $0xf8] sm:$0xff]
    %v119 = vld [vmem:[#allocation2 + $0x100] sm:$0xff]
    %v120 = vld [vmem:[#allocation2 + $0x108] sm:$0xff]
    %v121 = vld [vmem:[#allocation2 + $0x110] sm:$0xff]
    %v122 = vld [vmem:[#allocation2 + $0x118] sm:$0xff]
    %v123 = vld [vmem:[#allocation2 + $0x120] sm:$0xff]
    %v124 = vld [vmem:[#allocation2 + $0x128] sm:$0xff]
    %v125 = vld [vmem:[#allocation2 + $0x130] sm:$0xff]
    %v126 = vld [vmem:[#allocation2 + $0x138] sm:$0xff]
    %v127 = vld [vmem:[#allocation2 + $0x140] sm:$0xff]
    %v128 = vld [vmem:[#allocation2 + $0x148] sm:$0xff]
    %v129 = vld [vmem:[#allocation2 + $0x150] sm:$0xff]
    %v130 = vld [vmem:[#allocation2 + $0x158] sm:$0xff]
    %v131 = vld [vmem:[#allocation2 + $0x160] sm:$0xff]
    %v132 = vld [vmem:[#allocation2 + $0x168] sm:$0xff]
    %v133 = vld [vmem:[#allocation2 + $0x170] sm:$0xff]
    %v134 = vld [vmem:[#allocation2 + $0x178] sm:$0xff]
    %v135 = vld [vmem:[#allocation2 + $0x180] sm:$0xff]
    %v136 = vld [vmem:[#allocation2 + $0x188] sm:$0xff]
    %v137 = vld [vmem:[#allocation2 + $0x190] sm:$0xff]
    %v138 = vld [vmem:[#allocation2 + $0x198] sm:$0xff]
    %v139 = vld [vmem:[#allocation2 + $0x1a0] sm:$0xff]
    %v140 = vld [vmem:[#allocation2 + $0x1a8] sm:$0xff]
    %v141 = vld [vmem:[#allocation2 + $0x1b0] sm:$0xff]
    %v142 = vld [vmem:[#allocation2 + $0x1b8] sm:$0xff]
    %v143 = vld [vmem:[#allocation2 + $0x1c0] sm:$0xff]
    %v144 = vld [vmem:[#allocation2 + $0x1c8] sm:$0xff]
    %v145 = vld [vmem:[#allocation2 + $0x1d0] sm:$0xff]
    %v146 = vld [vmem:[#allocation2 + $0x1d8] sm:$0xff]
    %v147 = vld [vmem:[#allocation2 + $0x1e0] sm:$0xff]
    %v148 = vld [vmem:[#allocation2 + $0x1e8] sm:$0xff]
    %v149 = vld [vmem:[#allocation2 + $0x1f0] sm:$0xff]
    %v150 = vld [vmem:[#allocation2 + $0x1f8] sm:$0xff]
    %v151 = vld [vmem:[#allocation2 + $0x200] sm:$0xff]
    %v152 = vld [vmem:[#allocation2 + $0x208] sm:$0xff]
    %v153 = vld [vmem:[#allocation2 + $0x210] sm:$0xff]
    %v154 = vld [vmem:[#allocation2 + $0x218] sm:$0xff]
    %v155 = vld [vmem:[#allocation2 + $0x220] sm:$0xff]
    %v156 = vld [vmem:[#allocation2 + $0x228] sm:$0xff]
    %v157 = vld [vmem:[#allocation2 + $0x230] sm:$0xff]
    %v158 = vld [vmem:[#allocation2 + $0x238] sm:$0xff]
    %v159 = vld [vmem:[#allocation2 + $0x240] sm:$0xff]
    %v160 = vld [vmem:[#allocation2 + $0x248] sm:$0xff]
    %v161 = vld [vmem:[#allocation2 + $0x250] sm:$0xff]
    %v162 = vld [vmem:[#allocation2 + $0x258] sm:$0xff]
    %v163 = vld [vmem:[#allocation2 + $0x260] sm:$0xff]
    %v164 = vld [vmem:[#allocation2 + $0x268] sm:$0xff]
    %v165 = vld [vmem:[#allocation2 + $0x270] sm:$0xff]
    %v166 = vld [vmem:[#allocation2 + $0x278] sm:$0xff]
    %v167 = vld [vmem:[#allocation2 + $0x280] sm:$0xff]
    %v168 = vld [vmem:[#allocation2 + $0x288] sm:$0xff]
    %v169 = vld [vmem:[#allocation2 + $0x290] sm:$0xff]
    %v170 = vld [vmem:[#allocation2 + $0x298] sm:$0xff]
    %v171 = vld [vmem:[#allocation2 + $0x2a0] sm:$0xff]
    %v172 = vld [vmem:[#allocation2 + $0x2a8] sm:$0xff]
    %v173 = vld [vmem:[#allocation2 + $0x2b0] sm:$0xff]
    %v174 = vld [vmem:[#allocation2 + $0x2b8] sm:$0xff]
    %v175 = vld [vmem:[#allocation2 + $0x2c0] sm:$0xff]
    %v176 = vld [vmem:[#allocation2 + $0x2c8] sm:$0xff]
    %v177 = vld [vmem:[#allocation2 + $0x2d0] sm:$0xff]
    %v178 = vld [vmem:[#allocation2 + $0x2d8] sm:$0xff]
    %v179 = vld [vmem:[#allocation2 + $0x2e0] sm:$0xff]
    %v180 = vld [vmem:[#allocation2 + $0x2e8] sm:$0xff]
    %v181 = vld [vmem:[#allocation2 + $0x2f0] sm:$0xff]
    %v182 = vld [vmem:[#allocation2 + $0x2f8] sm:$0xff]
    %v183 = vld [vmem:[#allocation2 + $0x300] sm:$0xff]
    %v184 = vld [vmem:[#allocation2 + $0x308] sm:$0xff]
    %v185 = vld [vmem:[#allocation2 + $0x310] sm:$0xff]
    %v186 = vld [vmem:[#allocation2 + $0x318] sm:$0xff]
    %v187 = vld [vmem:[#allocation2 + $0x320] sm:$0xff]
    %v188 = vld [vmem:[#allocation2 + $0x328] sm:$0xff]
    %v189 = vld [vmem:[#allocation2 + $0x330] sm:$0xff]
    %v190 = vld [vmem:[#allocation2 + $0x338] sm:$0xff]
    %v191 = vld [vmem:[#allocation2 + $0x340] sm:$0xff]
    %v192 = vld [vmem:[#allocation2 + $0x348] sm:$0xff]
    %v193 = vld [vmem:[#allocation2 + $0x350] sm:$0xff]
    %v194 = vld [vmem:[#allocation2 + $0x358] sm:$0xff]
    %v195 = vld [vmem:[#allocation2 + $0x360] sm:$0xff]
    %v196 = vld [vmem:[#allocation2 + $0x368] sm:$0xff]
    %v197 = vld [vmem:[#allocation2 + $0x370] sm:$0xff]
    %v198 = vld [vmem:[#allocation2 + $0x378] sm:$0xff]
    %v199 = vld [vmem:[#allocation2 + $0x380] sm:$0xff]
    %v200 = vld [vmem:[#allocation2 + $0x388] sm:$0xff]
    %v201 = vld [vmem:[#allocation2 + $0x390] sm:$0xff]
    %v202 = vld [vmem:[#allocation2 + $0x398] sm:$0xff]
    %v203 = vld [vmem:[#allocation2 + $0x3a0] sm:$0xff]
    %v204 = vld [vmem:[#allocation2 + $0x3a8] sm:$0xff]
    %v205 = vld [vmem:[#allocation2 + $0x3b0] sm:$0xff]
    %v206 = vld [vmem:[#allocation2 + $0x3b8] sm:$0xff]
    %v207 = vld [vmem:[#allocation2 + $0x3c0] sm:$0xff]
    %v208 = vld [vmem:[#allocation2 + $0x3c8] sm:$0xff]
    %v209 = vld [vmem:[#allocation2 + $0x3d0] sm:$0xff]
    %v210 = vld [vmem:[#allocation2 + $0x3d8] sm:$0xff]
    %v211 = vld [vmem:[#allocation2 + $0x3e0] sm:$0xff]
    %v212 = vld [vmem:[#allocation2 + $0x3e8] sm:$0xff]
    %v213 = vld [vmem:[#allocation2 + $0x3f0] sm:$0xff]
    %v214 = vld [vmem:[#allocation2 + $0x3f8] sm:$0xff]
    %v217 = vunpack.c.l.b16 %v85
    %v218 = vunpack.c.h.b16 %v85
    %v219 = vunpack.c.l.b16 %v86
    %v220 = vunpack.c.h.b16 %v86
    %v221 = vpack.c.b16 %v217, %v217
    %v222 = vpack.c.b16 %v218, %v218
    %v223 = vpack.c.b16 %v219, %v219
    %v224 = vpack.c.b16 %v220, %v220
    %v357 = vunpack.c.l.b16 %v87
    %v358 = vunpack.c.h.b16 %v87
    %v359 = vunpack.c.l.b16 %v88
    %v360 = vunpack.c.h.b16 %v88
    %v361 = vunpack.c.l.b16 %v89
    %v362 = vunpack.c.h.b16 %v89
    %v363 = vunpack.c.l.b16 %v90
    %v364 = vunpack.c.h.b16 %v90
    %v365 = vunpack.c.l.b16 %v91
    %v366 = vunpack.c.h.b16 %v91
    %v367 = vunpack.c.l.b16 %v92
    %v368 = vunpack.c.h.b16 %v92
    %v369 = vunpack.c.l.b16 %v93
    %v370 = vunpack.c.h.b16 %v93
    %v371 = vunpack.c.l.b16 %v94
    %v372 = vunpack.c.h.b16 %v94
    %v373 = vunpack.c.l.b16 %v95
    %v374 = vunpack.c.h.b16 %v95
    %v375 = vunpack.c.l.b16 %v96
    %v376 = vunpack.c.h.b16 %v96
    %v377 = vunpack.c.l.b16 %v97
    %v378 = vunpack.c.h.b16 %v97
    %v379 = vunpack.c.l.b16 %v98
    %v380 = vunpack.c.h.b16 %v98
    %v381 = vunpack.c.l.b16 %v99
    %v382 = vunpack.c.h.b16 %v99
    %v383 = vunpack.c.l.b16 %v100
    %v384 = vunpack.c.h.b16 %v100
    %v385 = vunpack.c.l.b16 %v101
    %v386 = vunpack.c.h.b16 %v101
    %v387 = vunpack.c.l.b16 %v102
    %v388 = vunpack.c.h.b16 %v102
    %v389 = vunpack.c.l.b16 %v103
    %v390 = vunpack.c.h.b16 %v103
    %v391 = vunpack.c.l.b16 %v104
    %v392 = vunpack.c.h.b16 %v104
    %v393 = vunpack.c.l.b16 %v105
    %v394 = vunpack.c.h.b16 %v105
    %v395 = vunpack.c.l.b16 %v106
    %v396 = vunpack.c.h.b16 %v106
    %v397 = vunpack.c.l.b16 %v107
    %v398 = vunpack.c.h.b16 %v107
    %v399 = vunpack.c.l.b16 %v108
    %v400 = vunpack.c.h.b16 %v108
    %v401 = vunpack.c.l.b16 %v109
    %v402 = vunpack.c.h.b16 %v109
    %v403 = vunpack.c.l.b16 %v110
    %v404 = vunpack.c.h.b16 %v110
    %v405 = vunpack.c.l.b16 %v111
    %v406 = vunpack.c.h.b16 %v111
    %v407 = vunpack.c.l.b16 %v112
    %v408 = vunpack.c.h.b16 %v112
    %v409 = vunpack.c.l.b16 %v113
    %v410 = vunpack.c.h.b16 %v113
    %v411 = vunpack.c.l.b16 %v114
    %v412 = vunpack.c.h.b16 %v114
    %v413 = vunpack.c.l.b16 %v115
    %v414 = vunpack.c.h.b16 %v115
    %v415 = vunpack.c.l.b16 %v116
    %v416 = vunpack.c.h.b16 %v116
    %v417 = vunpack.c.l.b16 %v117
    %v418 = vunpack.c.h.b16 %v117
    %v419 = vunpack.c.l.b16 %v118
    %v420 = vunpack.c.h.b16 %v118
    %v421 = vunpack.c.l.b16 %v119
    %v422 = vunpack.c.h.b16 %v119
    %v423 = vunpack.c.l.b16 %v120
    %v424 = vunpack.c.h.b16 %v120
    %v425 = vunpack.c.l.b16 %v121
    %v426 = vunpack.c.h.b16 %v121
    %v427 = vunpack.c.l.b16 %v122
    %v428 = vunpack.c.h.b16 %v122
    %v429 = vunpack.c.l.b16 %v123
    %v430 = vunpack.c.h.b16 %v123
    %v431 = vunpack.c.l.b16 %v124
    %v432 = vunpack.c.h.b16 %v124
    %v433 = vunpack.c.l.b16 %v125
    %v434 = vunpack.c.h.b16 %v125
    %v435 = vunpack.c.l.b16 %v126
    %v436 = vunpack.c.h.b16 %v126
    %v437 = vunpack.c.l.b16 %v127
    %v438 = vunpack.c.h.b16 %v127
    %v439 = vunpack.c.l.b16 %v128
    %v440 = vunpack.c.h.b16 %v128
    %v441 = vunpack.c.l.b16 %v129
    %v442 = vunpack.c.h.b16 %v129
    %v443 = vunpack.c.l.b16 %v130
    %v444 = vunpack.c.h.b16 %v130
    %v445 = vunpack.c.l.b16 %v131
    %v446 = vunpack.c.h.b16 %v131
    %v447 = vunpack.c.l.b16 %v132
    %v448 = vunpack.c.h.b16 %v132
    %v449 = vunpack.c.l.b16 %v133
    %v450 = vunpack.c.h.b16 %v133
    %v451 = vunpack.c.l.b16 %v134
    %v452 = vunpack.c.h.b16 %v134
    %v453 = vunpack.c.l.b16 %v135
    %v454 = vunpack.c.h.b16 %v135
    %v455 = vunpack.c.l.b16 %v136
    %v456 = vunpack.c.h.b16 %v136
    %v457 = vunpack.c.l.b16 %v137
    %v458 = vunpack.c.h.b16 %v137
    %v459 = vunpack.c.l.b16 %v138
    %v460 = vunpack.c.h.b16 %v138
    %v461 = vunpack.c.l.b16 %v139
    %v462 = vunpack.c.h.b16 %v139
    %v463 = vunpack.c.l.b16 %v140
    %v464 = vunpack.c.h.b16 %v140
    %v465 = vunpack.c.l.b16 %v141
    %v466 = vunpack.c.h.b16 %v141
    %v467 = vunpack.c.l.b16 %v142
    %v468 = vunpack.c.h.b16 %v142
    %v469 = vunpack.c.l.b16 %v143
    %v470 = vunpack.c.h.b16 %v143
    %v471 = vunpack.c.l.b16 %v144
    %v472 = vunpack.c.h.b16 %v144
    %v473 = vunpack.c.l.b16 %v145
    %v474 = vunpack.c.h.b16 %v145
    %v475 = vunpack.c.l.b16 %v146
    %v476 = vunpack.c.h.b16 %v146
    %v477 = vunpack.c.l.b16 %v147
    %v478 = vunpack.c.h.b16 %v147
    %v479 = vunpack.c.l.b16 %v148
    %v480 = vunpack.c.h.b16 %v148
    %v481 = vunpack.c.l.b16 %v149
    %v482 = vunpack.c.h.b16 %v149
    %v483 = vunpack.c.l.b16 %v150
    %v484 = vunpack.c.h.b16 %v150
    %v485 = vunpack.c.l.b16 %v151
    %v486 = vunpack.c.h.b16 %v151
    %v487 = vunpack.c.l.b16 %v152
    %v488 = vunpack.c.h.b16 %v152
    %v489 = vunpack.c.l.b16 %v153
    %v490 = vunpack.c.h.b16 %v153
    %v491 = vunpack.c.l.b16 %v154
    %v492 = vunpack.c.h.b16 %v154
    %v493 = vunpack.c.l.b16 %v155
    %v494 = vunpack.c.h.b16 %v155
    %v495 = vunpack.c.l.b16 %v156
    %v496 = vunpack.c.h.b16 %v156
    %v497 = vunpack.c.l.b16 %v157
    %v498 = vunpack.c.h.b16 %v157
    %v499 = vunpack.c.l.b16 %v158
    %v500 = vunpack.c.h.b16 %v158
    %v501 = vunpack.c.l.b16 %v159
    %v502 = vunpack.c.h.b16 %v159
    %v503 = vunpack.c.l.b16 %v160
    %v504 = vunpack.c.h.b16 %v160
    %v505 = vunpack.c.l.b16 %v161
    %v506 = vunpack.c.h.b16 %v161
    %v507 = vunpack.c.l.b16 %v162
    %v508 = vunpack.c.h.b16 %v162
    %v509 = vunpack.c.l.b16 %v163
    %v510 = vunpack.c.h.b16 %v163
    %v511 = vunpack.c.l.b16 %v164
    %v512 = vunpack.c.h.b16 %v164
    %v513 = vunpack.c.l.b16 %v165
    %v514 = vunpack.c.h.b16 %v165
    %v515 = vunpack.c.l.b16 %v166
    %v516 = vunpack.c.h.b16 %v166
    %v517 = vunpack.c.l.b16 %v167
    %v518 = vunpack.c.h.b16 %v167
    %v519 = vunpack.c.l.b16 %v168
    %v520 = vunpack.c.h.b16 %v168
    %v521 = vunpack.c.l.b16 %v169
    %v522 = vunpack.c.h.b16 %v169
    %v523 = vunpack.c.l.b16 %v170
    %v524 = vunpack.c.h.b16 %v170
    %v525 = vunpack.c.l.b16 %v171
    %v526 = vunpack.c.h.b16 %v171
    %v527 = vunpack.c.l.b16 %v172
    %v528 = vunpack.c.h.b16 %v172
    %v529 = vunpack.c.l.b16 %v173
    %v530 = vunpack.c.h.b16 %v173
    %v531 = vunpack.c.l.b16 %v174
    %v532 = vunpack.c.h.b16 %v174
    %v533 = vunpack.c.l.b16 %v175
    %v534 = vunpack.c.h.b16 %v175
    %v535 = vunpack.c.l.b16 %v176
    %v536 = vunpack.c.h.b16 %v176
    %v537 = vunpack.c.l.b16 %v177
    %v538 = vunpack.c.h.b16 %v177
    %v539 = vunpack.c.l.b16 %v178
    %v540 = vunpack.c.h.b16 %v178
    %v541 = vunpack.c.l.b16 %v179
    %v542 = vunpack.c.h.b16 %v179
    %v543 = vunpack.c.l.b16 %v180
    %v544 = vunpack.c.h.b16 %v180
    %v545 = vunpack.c.l.b16 %v181
    %v546 = vunpack.c.h.b16 %v181
    %v547 = vunpack.c.l.b16 %v182
    %v548 = vunpack.c.h.b16 %v182
    %v549 = vunpack.c.l.b16 %v183
    %v550 = vunpack.c.h.b16 %v183
    %v551 = vunpack.c.l.b16 %v184
    %v552 = vunpack.c.h.b16 %v184
    %v553 = vunpack.c.l.b16 %v185
    %v554 = vunpack.c.h.b16 %v185
    %v555 = vunpack.c.l.b16 %v186
    %v556 = vunpack.c.h.b16 %v186
    %v557 = vunpack.c.l.b16 %v187
    %v558 = vunpack.c.h.b16 %v187
    %v559 = vunpack.c.l.b16 %v188
    %v560 = vunpack.c.h.b16 %v188
    %v561 = vunpack.c.l.b16 %v189
    %v562 = vunpack.c.h.b16 %v189
    %v563 = vunpack.c.l.b16 %v190
    %v564 = vunpack.c.h.b16 %v190
    %v565 = vunpack.c.l.b16 %v191
    %v566 = vunpack.c.h.b16 %v191
    %v567 = vunpack.c.l.b16 %v192
    %v568 = vunpack.c.h.b16 %v192
    %v569 = vunpack.c.l.b16 %v193
    %v570 = vunpack.c.h.b16 %v193
    %v571 = vunpack.c.l.b16 %v194
    %v572 = vunpack.c.h.b16 %v194
    %v573 = vunpack.c.l.b16 %v195
    %v574 = vunpack.c.h.b16 %v195
    %v575 = vunpack.c.l.b16 %v196
    %v576 = vunpack.c.h.b16 %v196
    %v577 = vunpack.c.l.b16 %v197
    %v578 = vunpack.c.h.b16 %v197
    %v579 = vunpack.c.l.b16 %v198
    %v580 = vunpack.c.h.b16 %v198
    %v581 = vunpack.c.l.b16 %v199
    %v582 = vunpack.c.h.b16 %v199
    %v583 = vunpack.c.l.b16 %v200
    %v584 = vunpack.c.h.b16 %v200
    %v585 = vunpack.c.l.b16 %v201
    %v586 = vunpack.c.h.b16 %v201
    %v587 = vunpack.c.l.b16 %v202
    %v588 = vunpack.c.h.b16 %v202
    %v589 = vunpack.c.l.b16 %v203
    %v590 = vunpack.c.h.b16 %v203
    %v591 = vunpack.c.l.b16 %v204
    %v592 = vunpack.c.h.b16 %v204
    %v593 = vunpack.c.l.b16 %v205
    %v594 = vunpack.c.h.b16 %v205
    %v595 = vunpack.c.l.b16 %v206
    %v596 = vunpack.c.h.b16 %v206
    %v597 = vunpack.c.l.b16 %v207
    %v598 = vunpack.c.h.b16 %v207
    %v599 = vunpack.c.l.b16 %v208
    %v600 = vunpack.c.h.b16 %v208
    %v601 = vunpack.c.l.b16 %v209
    %v602 = vunpack.c.h.b16 %v209
    %v603 = vunpack.c.l.b16 %v210
    %v604 = vunpack.c.h.b16 %v210
    %v605 = vunpack.c.l.b16 %v211
    %v606 = vunpack.c.h.b16 %v211
    %v607 = vunpack.c.l.b16 %v212
    %v608 = vunpack.c.h.b16 %v212
    %v609 = vunpack.c.l.b16 %v213
    %v610 = vunpack.c.h.b16 %v213
    %v611 = vunpack.c.l.b16 %v214
    %v612 = vunpack.c.h.b16 %v214
    %v613 = vpack.c.b16 %v361, %v357
    %v614 = vpack.c.b16 %v362, %v358
    %v615 = vpack.c.b16 %v363, %v359
    %v616 = vpack.c.b16 %v364, %v360
    %v617 = vpack.c.b16 %v369, %v365
    %v618 = vpack.c.b16 %v370, %v366
    %v619 = vpack.c.b16 %v371, %v367
    %v620 = vpack.c.b16 %v372, %v368
    %v621 = vpack.c.b16 %v377, %v373
    %v622 = vpack.c.b16 %v378, %v374
    %v623 = vpack.c.b16 %v379, %v375
    %v624 = vpack.c.b16 %v380, %v376
    %v625 = vpack.c.b16 %v385, %v381
    %v626 = vpack.c.b16 %v386, %v382
    %v627 = vpack.c.b16 %v387, %v383
    %v628 = vpack.c.b16 %v388, %v384
    %v629 = vpack.c.b16 %v393, %v389
    %v630 = vpack.c.b16 %v394, %v390
    %v631 = vpack.c.b16 %v395, %v391
    %v632 = vpack.c.b16 %v396, %v392
    %v633 = vpack.c.b16 %v401, %v397
    %v634 = vpack.c.b16 %v402, %v398
    %v635 = vpack.c.b16 %v403, %v399
    %v636 = vpack.c.b16 %v404, %v400
    %v637 = vpack.c.b16 %v409, %v405
    %v638 = vpack.c.b16 %v410, %v406
    %v639 = vpack.c.b16 %v411, %v407
    %v640 = vpack.c.b16 %v412, %v408
    %v641 = vpack.c.b16 %v417, %v413
    %v642 = vpack.c.b16 %v418, %v414
    %v643 = vpack.c.b16 %v419, %v415
    %v644 = vpack.c.b16 %v420, %v416
    %v645 = vpack.c.b16 %v425, %v421
    %v646 = vpack.c.b16 %v426, %v422
    %v647 = vpack.c.b16 %v427, %v423
    %v648 = vpack.c.b16 %v428, %v424
    %v649 = vpack.c.b16 %v433, %v429
    %v650 = vpack.c.b16 %v434, %v430
    %v651 = vpack.c.b16 %v435, %v431
    %v652 = vpack.c.b16 %v436, %v432
    %v653 = vpack.c.b16 %v441, %v437
    %v654 = vpack.c.b16 %v442, %v438
    %v655 = vpack.c.b16 %v443, %v439
    %v656 = vpack.c.b16 %v444, %v440
    %v657 = vpack.c.b16 %v449, %v445
    %v658 = vpack.c.b16 %v450, %v446
    %v659 = vpack.c.b16 %v451, %v447
    %v660 = vpack.c.b16 %v452, %v448
    %v661 = vpack.c.b16 %v457, %v453
    %v662 = vpack.c.b16 %v458, %v454
    %v663 = vpack.c.b16 %v459, %v455
    %v664 = vpack.c.b16 %v460, %v456
    %v665 = vpack.c.b16 %v465, %v461
    %v666 = vpack.c.b16 %v466, %v462
    %v667 = vpack.c.b16 %v467, %v463
    %v668 = vpack.c.b16 %v468, %v464
    %v669 = vpack.c.b16 %v473, %v469
    %v670 = vpack.c.b16 %v474, %v470
    %v671 = vpack.c.b16 %v475, %v471
    %v672 = vpack.c.b16 %v476, %v472
    %v673 = vpack.c.b16 %v481, %v477
    %v674 = vpack.c.b16 %v482, %v478
    %v675 = vpack.c.b16 %v483, %v479
    %v676 = vpack.c.b16 %v484, %v480
    %v677 = vpack.c.b16 %v489, %v485
    %v678 = vpack.c.b16 %v490, %v486
    %v679 = vpack.c.b16 %v491, %v487
    %v680 = vpack.c.b16 %v492, %v488
    %v681 = vpack.c.b16 %v497, %v493
    %v682 = vpack.c.b16 %v498, %v494
    %v683 = vpack.c.b16 %v499, %v495
    %v684 = vpack.c.b16 %v500, %v496
    %v685 = vpack.c.b16 %v505, %v501
    %v686 = vpack.c.b16 %v506, %v502
    %v687 = vpack.c.b16 %v507, %v503
    %v688 = vpack.c.b16 %v508, %v504
    %v689 = vpack.c.b16 %v513, %v509
    %v690 = vpack.c.b16 %v514, %v510
    %v691 = vpack.c.b16 %v515, %v511
    %v692 = vpack.c.b16 %v516, %v512
    %v693 = vpack.c.b16 %v521, %v517
    %v694 = vpack.c.b16 %v522, %v518
    %v695 = vpack.c.b16 %v523, %v519
    %v696 = vpack.c.b16 %v524, %v520
    %v697 = vpack.c.b16 %v529, %v525
    %v698 = vpack.c.b16 %v530, %v526
    %v699 = vpack.c.b16 %v531, %v527
    %v700 = vpack.c.b16 %v532, %v528
    %v701 = vpack.c.b16 %v537, %v533
    %v702 = vpack.c.b16 %v538, %v534
    %v703 = vpack.c.b16 %v539, %v535
    %v704 = vpack.c.b16 %v540, %v536
    %v705 = vpack.c.b16 %v545, %v541
    %v706 = vpack.c.b16 %v546, %v542
    %v707 = vpack.c.b16 %v547, %v543
    %v708 = vpack.c.b16 %v548, %v544
    %v709 = vpack.c.b16 %v553, %v549
    %v710 = vpack.c.b16 %v554, %v550
    %v711 = vpack.c.b16 %v555, %v551
    %v712 = vpack.c.b16 %v556, %v552
    %v713 = vpack.c.b16 %v561, %v557
    %v714 = vpack.c.b16 %v562, %v558
    %v715 = vpack.c.b16 %v563, %v559
    %v716 = vpack.c.b16 %v564, %v560
    %v717 = vpack.c.b16 %v569, %v565
    %v718 = vpack.c.b16 %v570, %v566
    %v719 = vpack.c.b16 %v571, %v567
    %v720 = vpack.c.b16 %v572, %v568
    %v721 = vpack.c.b16 %v577, %v573
    %v722 = vpack.c.b16 %v578, %v574
    %v723 = vpack.c.b16 %v579, %v575
    %v724 = vpack.c.b16 %v580, %v576
    %v725 = vpack.c.b16 %v585, %v581
    %v726 = vpack.c.b16 %v586, %v582
    %v727 = vpack.c.b16 %v587, %v583
    %v728 = vpack.c.b16 %v588, %v584
    %v729 = vpack.c.b16 %v593, %v589
    %v730 = vpack.c.b16 %v594, %v590
    %v731 = vpack.c.b16 %v595, %v591
    %v732 = vpack.c.b16 %v596, %v592
    %v733 = vpack.c.b16 %v601, %v597
    %v734 = vpack.c.b16 %v602, %v598
    %v735 = vpack.c.b16 %v603, %v599
    %v736 = vpack.c.b16 %v604, %v600
    %v737 = vpack.c.b16 %v609, %v605
    %v738 = vpack.c.b16 %v610, %v606
    %v739 = vpack.c.b16 %v611, %v607
    %v740 = vpack.c.b16 %v612, %v608
    %869 = vmatprep.subr.bf16.mxu0 %v642
    %870 = vmatpush1.bf16.msra.mxu0 %v641
    %871 = vmatprep.subr.bf16.mxu0 %v638
    %872 = vmatpush1.bf16.msra.mxu0 %v637
    %873 = vmatprep.subr.bf16.mxu0 %v634
    %874 = vmatpush1.bf16.msra.mxu0 %v633
    %875 = vmatprep.subr.bf16.mxu0 %v630
    %876 = vmatpush1.bf16.msra.mxu0 %v629
    %877 = vmatprep.subr.bf16.mxu0 %v626
    %878 = vmatpush1.bf16.msra.mxu0 %v625
    %879 = vmatprep.subr.bf16.mxu0 %v622
    %880 = vmatpush1.bf16.msra.mxu0 %v621
    %881 = vmatprep.subr.bf16.mxu0 %v618
    %882 = vmatpush1.bf16.msra.mxu0 %v617
    %883 = vmatprep.subr.bf16.mxu0 %v614
    %884 = vmatpush1.bf16.msra.mxu0 %v613
    %885 = vmatprep.subr.bf16.mxu0 %v674
    %886 = vmatpush2.bf16.msra.mxu0 %v673
    %887 = vmatprep.subr.bf16.mxu0 %v670
    %888 = vmatpush2.bf16.msra.mxu0 %v669
    %889 = vmatprep.subr.bf16.mxu0 %v666
    %890 = vmatpush2.bf16.msra.mxu0 %v665
    %891 = vmatprep.subr.bf16.mxu0 %v662
    %892 = vmatpush2.bf16.msra.mxu0 %v661
    %893 = vmatprep.subr.bf16.mxu0 %v658
    %894 = vmatpush2.bf16.msra.mxu0 %v657
    %895 = vmatprep.subr.bf16.mxu0 %v654
    %896 = vmatpush2.bf16.msra.mxu0 %v653
    %897 = vmatprep.subr.bf16.mxu0 %v650
    %898 = vmatpush2.bf16.msra.mxu0 %v649
    %899 = vmatprep.subr.bf16.mxu0 %v646
    %900 = vmatpush2.bf16.msra.mxu0 %v645
    %901 = vmatprep.mubr.bf16.mxu0 %v222
    %902 = vmatmul.mubr.bf16.gmra.mxu0 %v221
    %v903 = vpop.f32.mrf.mxu0
    %v904 = vadd.f32 0.0, %v903
    %v905 = vpop.f32.mrf.mxu0
    %v906 = vadd.f32 0.0, %v905
    %v907 = vpop.f32.mrf.mxu0
    %v908 = vpop.f32.mrf.mxu0
    %909 = vdwg.mxu0
    %910 = vmatprep.subr.bf16.mxu0 %v706
    %911 = vmatpush1.bf16.msra.mxu0 %v705
    %912 = vmatprep.subr.bf16.mxu0 %v702
    %913 = vmatpush1.bf16.msra.mxu0 %v701
    %914 = vmatprep.subr.bf16.mxu0 %v698
    %915 = vmatpush1.bf16.msra.mxu0 %v697
    %916 = vmatprep.subr.bf16.mxu0 %v694
    %917 = vmatpush1.bf16.msra.mxu0 %v693
    %918 = vmatprep.subr.bf16.mxu0 %v690
    %919 = vmatpush1.bf16.msra.mxu0 %v689
    %920 = vmatprep.subr.bf16.mxu0 %v686
    %921 = vmatpush1.bf16.msra.mxu0 %v685
    %922 = vmatprep.subr.bf16.mxu0 %v682
    %923 = vmatpush1.bf16.msra.mxu0 %v681
    %924 = vmatprep.subr.bf16.mxu0 %v678
    %925 = vmatpush1.bf16.msra.mxu0 %v677
    %926 = vmatprep.subr.bf16.mxu0 %v738
    %927 = vmatpush2.bf16.msra.mxu0 %v737
    %928 = vmatprep.subr.bf16.mxu0 %v734
    %929 = vmatpush2.bf16.msra.mxu0 %v733
    %930 = vmatprep.subr.bf16.mxu0 %v730
    %931 = vmatpush2.bf16.msra.mxu0 %v729
    %932 = vmatprep.subr.bf16.mxu0 %v726
    %933 = vmatpush2.bf16.msra.mxu0 %v725
    %934 = vmatprep.subr.bf16.mxu0 %v722
    %935 = vmatpush2.bf16.msra.mxu0 %v721
    %936 = vmatprep.subr.bf16.mxu0 %v718
    %937 = vmatpush2.bf16.msra.mxu0 %v717
    %938 = vmatprep.subr.bf16.mxu0 %v714
    %939 = vmatpush2.bf16.msra.mxu0 %v713
    %940 = vmatprep.subr.bf16.mxu0 %v710
    %941 = vmatpush2.bf16.msra.mxu0 %v709
    %942 = vmatprep.mubr.bf16.mxu0 %v224
    %943 = vmatmul.mubr.bf16.gmra.mxu0 %v223
    %v944 = vpop.f32.mrf.mxu0
    %v945 = vadd.f32 %v904, %v944
    %v946 = vpop.f32.mrf.mxu0
    %v947 = vadd.f32 %v906, %v946
    %v948 = vpop.f32.mrf.mxu0
    %v949 = vpop.f32.mrf.mxu0
    %950 = vdwg.mxu0
    %951 = vmatprep.subr.bf16.mxu0 %v644
    %952 = vmatpush1.bf16.msra.mxu0 %v643
    %953 = vmatprep.subr.bf16.mxu0 %v640
    %954 = vmatpush1.bf16.msra.mxu0 %v639
    %955 = vmatprep.subr.bf16.mxu0 %v636
    %956 = vmatpush1.bf16.msra.mxu0 %v635
    %957 = vmatprep.subr.bf16.mxu0 %v632
    %958 = vmatpush1.bf16.msra.mxu0 %v631
    %959 = vmatprep.subr.bf16.mxu0 %v628
    %960 = vmatpush1.bf16.msra.mxu0 %v627
    %961 = vmatprep.subr.bf16.mxu0 %v624
    %962 = vmatpush1.bf16.msra.mxu0 %v623
    %963 = vmatprep.subr.bf16.mxu0 %v620
    %964 = vmatpush1.bf16.msra.mxu0 %v619
    %965 = vmatprep.subr.bf16.mxu0 %v616
    %966 = vmatpush1.bf16.msra.mxu0 %v615
    %967 = vmatprep.subr.bf16.mxu0 %v676
    %968 = vmatpush2.bf16.msra.mxu0 %v675
    %969 = vmatprep.subr.bf16.mxu0 %v672
    %970 = vmatpush2.bf16.msra.mxu0 %v671
    %971 = vmatprep.subr.bf16.mxu0 %v668
    %972 = vmatpush2.bf16.msra.mxu0 %v667
    %973 = vmatprep.subr.bf16.mxu0 %v664
    %974 = vmatpush2.bf16.msra.mxu0 %v663
    %975 = vmatprep.subr.bf16.mxu0 %v660
    %976 = vmatpush2.bf16.msra.mxu0 %v659
    %977 = vmatprep.subr.bf16.mxu0 %v656
    %978 = vmatpush2.bf16.msra.mxu0 %v655
    %979 = vmatprep.subr.bf16.mxu0 %v652
    %980 = vmatpush2.bf16.msra.mxu0 %v651
    %981 = vmatprep.subr.bf16.mxu0 %v648
    %982 = vmatpush2.bf16.msra.mxu0 %v647
    %983 = vmatprep.mubr.bf16.mxu0 %v222
    %984 = vmatmul.mubr.bf16.gmra.mxu0 %v221
    %v985 = vpop.f32.mrf.mxu0
    %v986 = vadd.f32 0.0, %v985
    %v987 = vpop.f32.mrf.mxu0
    %v988 = vadd.f32 0.0, %v987
    %v989 = vpop.f32.mrf.mxu0
    %v990 = vpop.f32.mrf.mxu0
    %991 = vdwg.mxu0
    %992 = vmatprep.subr.bf16.mxu0 %v708
    %993 = vmatpush1.bf16.msra.mxu0 %v707
    %994 = vmatprep.subr.bf16.mxu0 %v704
    %995 = vmatpush1.bf16.msra.mxu0 %v703
    %996 = vmatprep.subr.bf16.mxu0 %v700
    %997 = vmatpush1.bf16.msra.mxu0 %v699
    %998 = vmatprep.subr.bf16.mxu0 %v696
    %999 = vmatpush1.bf16.msra.mxu0 %v695
    %1000 = vmatprep.subr.bf16.mxu0 %v692
    %1001 = vmatpush1.bf16.msra.mxu0 %v691
    %1002 = vmatprep.subr.bf16.mxu0 %v688
    %1003 = vmatpush1.bf16.msra.mxu0 %v687
    %1004 = vmatprep.subr.bf16.mxu0 %v684
    %1005 = vmatpush1.bf16.msra.mxu0 %v683
    %1006 = vmatprep.subr.bf16.mxu0 %v680
    %1007 = vmatpush1.bf16.msra.mxu0 %v679
    %1008 = vmatprep.subr.bf16.mxu0 %v740
    %1009 = vmatpush2.bf16.msra.mxu0 %v739
    %1010 = vmatprep.subr.bf16.mxu0 %v736
    %1011 = vmatpush2.bf16.msra.mxu0 %v735
    %1012 = vmatprep.subr.bf16.mxu0 %v732
    %1013 = vmatpush2.bf16.msra.mxu0 %v731
    %1014 = vmatprep.subr.bf16.mxu0 %v728
    %1015 = vmatpush2.bf16.msra.mxu0 %v727
    %1016 = vmatprep.subr.bf16.mxu0 %v724
    %1017 = vmatpush2.bf16.msra.mxu0 %v723
    %1018 = vmatprep.subr.bf16.mxu0 %v720
    %1019 = vmatpush2.bf16.msra.mxu0 %v719
    %1020 = vmatprep.subr.bf16.mxu0 %v716
    %1021 = vmatpush2.bf16.msra.mxu0 %v715
    %1022 = vmatprep.subr.bf16.mxu0 %v712
    %1023 = vmatpush2.bf16.msra.mxu0 %v711
    %1024 = vmatprep.mubr.bf16.mxu0 %v224
    %1025 = vmatmul.mubr.bf16.gmra.mxu0 %v223
    %v1026 = vpop.f32.mrf.mxu0
    %v1027 = vadd.f32 %v986, %v1026
    %v1028 = vpop.f32.mrf.mxu0
    %v1029 = vadd.f32 %v988, %v1028
    %v1030 = vpop.f32.mrf.mxu0
    %v1031 = vpop.f32.mrf.mxu0
    %1032 = vdwg.mxu0
    %v1033 = vmax.f32 %v945, 0.0
    %v1034 = vmax.f32 %v947, 0.0
    %v1035 = vmax.f32 %v1027, 0.0
    %v1036 = vmax.f32 %v1029, 0.0
    %v1037 = vpack.c.bf16 %v1033, %v1033
    %v1038 = vpack.c.bf16 %v1034, %v1034
    %v1039 = vpack.c.bf16 %v1035, %v1035
    %v1040 = vpack.c.bf16 %v1036, %v1036
    %v1041 = vld [vmem:[#allocation4] sm:$0xff]
    %v1042 = vld [vmem:[#allocation4 + $0x8] sm:$0xff]
    %v1043 = vld [vmem:[#allocation4 + $0x10] sm:$0xff]
    %v1044 = vld [vmem:[#allocation4 + $0x18] sm:$0xff]
    %v1045 = vld [vmem:[#allocation4 + $0x20] sm:$0xff]
    %v1046 = vld [vmem:[#allocation4 + $0x28] sm:$0xff]
    %v1047 = vld [vmem:[#allocation4 + $0x30] sm:$0xff]
    %v1048 = vld [vmem:[#allocation4 + $0x38] sm:$0xff]
    %v1049 = vld [vmem:[#allocation4 + $0x40] sm:$0xff]
    %v1050 = vld [vmem:[#allocation4 + $0x48] sm:$0xff]
    %v1051 = vld [vmem:[#allocation4 + $0x50] sm:$0xff]
    %v1052 = vld [vmem:[#allocation4 + $0x58] sm:$0xff]
    %v1053 = vld [vmem:[#allocation4 + $0x60] sm:$0xff]
    %v1054 = vld [vmem:[#allocation4 + $0x68] sm:$0xff]
    %v1055 = vld [vmem:[#allocation4 + $0x70] sm:$0xff]
    %v1056 = vld [vmem:[#allocation4 + $0x78] sm:$0xff]
    %v1057 = vld [vmem:[#allocation4 + $0x80] sm:$0xff]
    %v1058 = vld [vmem:[#allocation4 + $0x88] sm:$0xff]
    %v1059 = vld [vmem:[#allocation4 + $0x90] sm:$0xff]
    %v1060 = vld [vmem:[#allocation4 + $0x98] sm:$0xff]
    %v1061 = vld [vmem:[#allocation4 + $0xa0] sm:$0xff]
    %v1062 = vld [vmem:[#allocation4 + $0xa8] sm:$0xff]
    %v1063 = vld [vmem:[#allocation4 + $0xb0] sm:$0xff]
    %v1064 = vld [vmem:[#allocation4 + $0xb8] sm:$0xff]
    %v1065 = vld [vmem:[#allocation4 + $0xc0] sm:$0xff]
    %v1066 = vld [vmem:[#allocation4 + $0xc8] sm:$0xff]
    %v1067 = vld [vmem:[#allocation4 + $0xd0] sm:$0xff]
    %v1068 = vld [vmem:[#allocation4 + $0xd8] sm:$0xff]
    %v1069 = vld [vmem:[#allocation4 + $0xe0] sm:$0xff]
    %v1070 = vld [vmem:[#allocation4 + $0xe8] sm:$0xff]
    %v1071 = vld [vmem:[#allocation4 + $0xf0] sm:$0xff]
    %v1072 = vld [vmem:[#allocation4 + $0xf8] sm:$0xff]
    %v1073 = vld [vmem:[#allocation4 + $0x100] sm:$0xff]
    %v1074 = vld [vmem:[#allocation4 + $0x108] sm:$0xff]
    %v1075 = vld [vmem:[#allocation4 + $0x110] sm:$0xff]
    %v1076 = vld [vmem:[#allocation4 + $0x118] sm:$0xff]
    %v1077 = vld [vmem:[#allocation4 + $0x120] sm:$0xff]
    %v1078 = vld [vmem:[#allocation4 + $0x128] sm:$0xff]
    %v1079 = vld [vmem:[#allocation4 + $0x130] sm:$0xff]
    %v1080 = vld [vmem:[#allocation4 + $0x138] sm:$0xff]
    %v1081 = vld [vmem:[#allocation4 + $0x140] sm:$0xff]
    %v1082 = vld [vmem:[#allocation4 + $0x148] sm:$0xff]
    %v1083 = vld [vmem:[#allocation4 + $0x150] sm:$0xff]
    %v1084 = vld [vmem:[#allocation4 + $0x158] sm:$0xff]
    %v1085 = vld [vmem:[#allocation4 + $0x160] sm:$0xff]
    %v1086 = vld [vmem:[#allocation4 + $0x168] sm:$0xff]
    %v1087 = vld [vmem:[#allocation4 + $0x170] sm:$0xff]
    %v1088 = vld [vmem:[#allocation4 + $0x178] sm:$0xff]
    %v1089 = vld [vmem:[#allocation4 + $0x180] sm:$0xff]
    %v1090 = vld [vmem:[#allocation4 + $0x188] sm:$0xff]
    %v1091 = vld [vmem:[#allocation4 + $0x190] sm:$0xff]
    %v1092 = vld [vmem:[#allocation4 + $0x198] sm:$0xff]
    %v1093 = vld [vmem:[#allocation4 + $0x1a0] sm:$0xff]
    %v1094 = vld [vmem:[#allocation4 + $0x1a8] sm:$0xff]
    %v1095 = vld [vmem:[#allocation4 + $0x1b0] sm:$0xff]
    %v1096 = vld [vmem:[#allocation4 + $0x1b8] sm:$0xff]
    %v1097 = vld [vmem:[#allocation4 + $0x1c0] sm:$0xff]
    %v1098 = vld [vmem:[#allocation4 + $0x1c8] sm:$0xff]
    %v1099 = vld [vmem:[#allocation4 + $0x1d0] sm:$0xff]
    %v1100 = vld [vmem:[#allocation4 + $0x1d8] sm:$0xff]
    %v1101 = vld [vmem:[#allocation4 + $0x1e0] sm:$0xff]
    %v1102 = vld [vmem:[#allocation4 + $0x1e8] sm:$0xff]
    %v1103 = vld [vmem:[#allocation4 + $0x1f0] sm:$0xff]
    %v1104 = vld [vmem:[#allocation4 + $0x1f8] sm:$0xff]
    %v1169 = vunpack.c.l.b16 %v1041
    %v1170 = vunpack.c.h.b16 %v1041
    %v1171 = vunpack.c.l.b16 %v1042
    %v1172 = vunpack.c.h.b16 %v1042
    %v1173 = vunpack.c.l.b16 %v1043
    %v1174 = vunpack.c.h.b16 %v1043
    %v1175 = vunpack.c.l.b16 %v1044
    %v1176 = vunpack.c.h.b16 %v1044
    %v1177 = vunpack.c.l.b16 %v1045
    %v1178 = vunpack.c.h.b16 %v1045
    %v1179 = vunpack.c.l.b16 %v1046
    %v1180 = vunpack.c.h.b16 %v1046
    %v1181 = vunpack.c.l.b16 %v1047
    %v1182 = vunpack.c.h.b16 %v1047
    %v1183 = vunpack.c.l.b16 %v1048
    %v1184 = vunpack.c.h.b16 %v1048
    %v1185 = vunpack.c.l.b16 %v1049
    %v1186 = vunpack.c.h.b16 %v1049
    %v1187 = vunpack.c.l.b16 %v1050
    %v1188 = vunpack.c.h.b16 %v1050
    %v1189 = vunpack.c.l.b16 %v1051
    %v1190 = vunpack.c.h.b16 %v1051
    %v1191 = vunpack.c.l.b16 %v1052
    %v1192 = vunpack.c.h.b16 %v1052
    %v1193 = vunpack.c.l.b16 %v1053
    %v1194 = vunpack.c.h.b16 %v1053
    %v1195 = vunpack.c.l.b16 %v1054
    %v1196 = vunpack.c.h.b16 %v1054
    %v1197 = vunpack.c.l.b16 %v1055
    %v1198 = vunpack.c.h.b16 %v1055
    %v1199 = vunpack.c.l.b16 %v1056
    %v1200 = vunpack.c.h.b16 %v1056
    %v1201 = vunpack.c.l.b16 %v1057
    %v1202 = vunpack.c.h.b16 %v1057
    %v1203 = vunpack.c.l.b16 %v1058
    %v1204 = vunpack.c.h.b16 %v1058
    %v1205 = vunpack.c.l.b16 %v1059
    %v1206 = vunpack.c.h.b16 %v1059
    %v1207 = vunpack.c.l.b16 %v1060
    %v1208 = vunpack.c.h.b16 %v1060
    %v1209 = vunpack.c.l.b16 %v1061
    %v1210 = vunpack.c.h.b16 %v1061
    %v1211 = vunpack.c.l.b16 %v1062
    %v1212 = vunpack.c.h.b16 %v1062
    %v1213 = vunpack.c.l.b16 %v1063
    %v1214 = vunpack.c.h.b16 %v1063
    %v1215 = vunpack.c.l.b16 %v1064
    %v1216 = vunpack.c.h.b16 %v1064
    %v1217 = vunpack.c.l.b16 %v1065
    %v1218 = vunpack.c.h.b16 %v1065
    %v1219 = vunpack.c.l.b16 %v1066
    %v1220 = vunpack.c.h.b16 %v1066
    %v1221 = vunpack.c.l.b16 %v1067
    %v1222 = vunpack.c.h.b16 %v1067
    %v1223 = vunpack.c.l.b16 %v1068
    %v1224 = vunpack.c.h.b16 %v1068
    %v1225 = vunpack.c.l.b16 %v1069
    %v1226 = vunpack.c.h.b16 %v1069
    %v1227 = vunpack.c.l.b16 %v1070
    %v1228 = vunpack.c.h.b16 %v1070
    %v1229 = vunpack.c.l.b16 %v1071
    %v1230 = vunpack.c.h.b16 %v1071
    %v1231 = vunpack.c.l.b16 %v1072
    %v1232 = vunpack.c.h.b16 %v1072
    %v1233 = vunpack.c.l.b16 %v1073
    %v1234 = vunpack.c.h.b16 %v1073
    %v1235 = vunpack.c.l.b16 %v1074
    %v1236 = vunpack.c.h.b16 %v1074
    %v1237 = vunpack.c.l.b16 %v1075
    %v1238 = vunpack.c.h.b16 %v1075
    %v1239 = vunpack.c.l.b16 %v1076
    %v1240 = vunpack.c.h.b16 %v1076
    %v1241 = vunpack.c.l.b16 %v1077
    %v1242 = vunpack.c.h.b16 %v1077
    %v1243 = vunpack.c.l.b16 %v1078
    %v1244 = vunpack.c.h.b16 %v1078
    %v1245 = vunpack.c.l.b16 %v1079
    %v1246 = vunpack.c.h.b16 %v1079
    %v1247 = vunpack.c.l.b16 %v1080
    %v1248 = vunpack.c.h.b16 %v1080
    %v1249 = vunpack.c.l.b16 %v1081
    %v1250 = vunpack.c.h.b16 %v1081
    %v1251 = vunpack.c.l.b16 %v1082
    %v1252 = vunpack.c.h.b16 %v1082
    %v1253 = vunpack.c.l.b16 %v1083
    %v1254 = vunpack.c.h.b16 %v1083
    %v1255 = vunpack.c.l.b16 %v1084
    %v1256 = vunpack.c.h.b16 %v1084
    %v1257 = vunpack.c.l.b16 %v1085
    %v1258 = vunpack.c.h.b16 %v1085
    %v1259 = vunpack.c.l.b16 %v1086
    %v1260 = vunpack.c.h.b16 %v1086
    %v1261 = vunpack.c.l.b16 %v1087
    %v1262 = vunpack.c.h.b16 %v1087
    %v1263 = vunpack.c.l.b16 %v1088
    %v1264 = vunpack.c.h.b16 %v1088
    %v1265 = vunpack.c.l.b16 %v1089
    %v1266 = vunpack.c.h.b16 %v1089
    %v1267 = vunpack.c.l.b16 %v1090
    %v1268 = vunpack.c.h.b16 %v1090
    %v1269 = vunpack.c.l.b16 %v1091
    %v1270 = vunpack.c.h.b16 %v1091
    %v1271 = vunpack.c.l.b16 %v1092
    %v1272 = vunpack.c.h.b16 %v1092
    %v1273 = vunpack.c.l.b16 %v1093
    %v1274 = vunpack.c.h.b16 %v1093
    %v1275 = vunpack.c.l.b16 %v1094
    %v1276 = vunpack.c.h.b16 %v1094
    %v1277 = vunpack.c.l.b16 %v1095
    %v1278 = vunpack.c.h.b16 %v1095
    %v1279 = vunpack.c.l.b16 %v1096
    %v1280 = vunpack.c.h.b16 %v1096
    %v1281 = vunpack.c.l.b16 %v1097
    %v1282 = vunpack.c.h.b16 %v1097
    %v1283 = vunpack.c.l.b16 %v1098
    %v1284 = vunpack.c.h.b16 %v1098
    %v1285 = vunpack.c.l.b16 %v1099
    %v1286 = vunpack.c.h.b16 %v1099
    %v1287 = vunpack.c.l.b16 %v1100
    %v1288 = vunpack.c.h.b16 %v1100
    %v1289 = vunpack.c.l.b16 %v1101
    %v1290 = vunpack.c.h.b16 %v1101
    %v1291 = vunpack.c.l.b16 %v1102
    %v1292 = vunpack.c.h.b16 %v1102
    %v1293 = vunpack.c.l.b16 %v1103
    %v1294 = vunpack.c.h.b16 %v1103
    %v1295 = vunpack.c.l.b16 %v1104
    %v1296 = vunpack.c.h.b16 %v1104
    %v1297 = vpack.c.b16 %v1171, %v1169
    %v1298 = vpack.c.b16 %v1172, %v1170
    %v1299 = vpack.c.b16 %v1175, %v1173
    %v1300 = vpack.c.b16 %v1176, %v1174
    %v1301 = vpack.c.b16 %v1179, %v1177
    %v1302 = vpack.c.b16 %v1180, %v1178
    %v1303 = vpack.c.b16 %v1183, %v1181
    %v1304 = vpack.c.b16 %v1184, %v1182
    %v1305 = vpack.c.b16 %v1187, %v1185
    %v1306 = vpack.c.b16 %v1188, %v1186
    %v1307 = vpack.c.b16 %v1191, %v1189
    %v1308 = vpack.c.b16 %v1192, %v1190
    %v1309 = vpack.c.b16 %v1195, %v1193
    %v1310 = vpack.c.b16 %v1196, %v1194
    %v1311 = vpack.c.b16 %v1199, %v1197
    %v1312 = vpack.c.b16 %v1200, %v1198
    %v1313 = vpack.c.b16 %v1203, %v1201
    %v1314 = vpack.c.b16 %v1204, %v1202
    %v1315 = vpack.c.b16 %v1207, %v1205
    %v1316 = vpack.c.b16 %v1208, %v1206
    %v1317 = vpack.c.b16 %v1211, %v1209
    %v1318 = vpack.c.b16 %v1212, %v1210
    %v1319 = vpack.c.b16 %v1215, %v1213
    %v1320 = vpack.c.b16 %v1216, %v1214
    %v1321 = vpack.c.b16 %v1219, %v1217
    %v1322 = vpack.c.b16 %v1220, %v1218
    %v1323 = vpack.c.b16 %v1223, %v1221
    %v1324 = vpack.c.b16 %v1224, %v1222
    %v1325 = vpack.c.b16 %v1227, %v1225
    %v1326 = vpack.c.b16 %v1228, %v1226
    %v1327 = vpack.c.b16 %v1231, %v1229
    %v1328 = vpack.c.b16 %v1232, %v1230
    %v1329 = vpack.c.b16 %v1235, %v1233
    %v1330 = vpack.c.b16 %v1236, %v1234
    %v1331 = vpack.c.b16 %v1239, %v1237
    %v1332 = vpack.c.b16 %v1240, %v1238
    %v1333 = vpack.c.b16 %v1243, %v1241
    %v1334 = vpack.c.b16 %v1244, %v1242
    %v1335 = vpack.c.b16 %v1247, %v1245
    %v1336 = vpack.c.b16 %v1248, %v1246
    %v1337 = vpack.c.b16 %v1251, %v1249
    %v1338 = vpack.c.b16 %v1252, %v1250
    %v1339 = vpack.c.b16 %v1255, %v1253
    %v1340 = vpack.c.b16 %v1256, %v1254
    %v1341 = vpack.c.b16 %v1259, %v1257
    %v1342 = vpack.c.b16 %v1260, %v1258
    %v1343 = vpack.c.b16 %v1263, %v1261
    %v1344 = vpack.c.b16 %v1264, %v1262
    %v1345 = vpack.c.b16 %v1267, %v1265
    %v1346 = vpack.c.b16 %v1268, %v1266
    %v1347 = vpack.c.b16 %v1271, %v1269
    %v1348 = vpack.c.b16 %v1272, %v1270
    %v1349 = vpack.c.b16 %v1275, %v1273
    %v1350 = vpack.c.b16 %v1276, %v1274
    %v1351 = vpack.c.b16 %v1279, %v1277
    %v1352 = vpack.c.b16 %v1280, %v1278
    %v1353 = vpack.c.b16 %v1283, %v1281
    %v1354 = vpack.c.b16 %v1284, %v1282
    %v1355 = vpack.c.b16 %v1287, %v1285
    %v1356 = vpack.c.b16 %v1288, %v1286
    %v1357 = vpack.c.b16 %v1291, %v1289
    %v1358 = vpack.c.b16 %v1292, %v1290
    %v1359 = vpack.c.b16 %v1295, %v1293
    %v1360 = vpack.c.b16 %v1296, %v1294
    %1425 = vmatprep.subr.bf16.mxu0 %v1312
    %1426 = vmatpush1.bf16.msra.mxu0 %v1311
    %1427 = vmatprep.subr.bf16.mxu0 %v1310
    %1428 = vmatpush1.bf16.msra.mxu0 %v1309
    %1429 = vmatprep.subr.bf16.mxu0 %v1308
    %1430 = vmatpush1.bf16.msra.mxu0 %v1307
    %1431 = vmatprep.subr.bf16.mxu0 %v1306
    %1432 = vmatpush1.bf16.msra.mxu0 %v1305
    %1433 = vmatprep.subr.bf16.mxu0 %v1304
    %1434 = vmatpush1.bf16.msra.mxu0 %v1303
    %1435 = vmatprep.subr.bf16.mxu0 %v1302
    %1436 = vmatpush1.bf16.msra.mxu0 %v1301
    %1437 = vmatprep.subr.bf16.mxu0 %v1300
    %1438 = vmatpush1.bf16.msra.mxu0 %v1299
    %1439 = vmatprep.subr.bf16.mxu0 %v1298
    %1440 = vmatpush1.bf16.msra.mxu0 %v1297
    %1441 = vmatprep.subr.bf16.mxu0 %v1328
    %1442 = vmatpush2.bf16.msra.mxu0 %v1327
    %1443 = vmatprep.subr.bf16.mxu0 %v1326
    %1444 = vmatpush2.bf16.msra.mxu0 %v1325
    %1445 = vmatprep.subr.bf16.mxu0 %v1324
    %1446 = vmatpush2.bf16.msra.mxu0 %v1323
    %1447 = vmatprep.subr.bf16.mxu0 %v1322
    %1448 = vmatpush2.bf16.msra.mxu0 %v1321
    %1449 = vmatprep.subr.bf16.mxu0 %v1320
    %1450 = vmatpush2.bf16.msra.mxu0 %v1319
    %1451 = vmatprep.subr.bf16.mxu0 %v1318
    %1452 = vmatpush2.bf16.msra.mxu0 %v1317
    %1453 = vmatprep.subr.bf16.mxu0 %v1316
    %1454 = vmatpush2.bf16.msra.mxu0 %v1315
    %1455 = vmatprep.subr.bf16.mxu0 %v1314
    %1456 = vmatpush2.bf16.msra.mxu0 %v1313
    %1457 = vmatprep.mubr.bf16.mxu0 %v1038
    %1458 = vmatmul.mubr.bf16.gmra.mxu0 %v1037
    %v1459 = vpop.f32.mrf.mxu0
    %v1460 = vadd.f32 0.0, %v1459
    %v1461 = vpop.f32.mrf.mxu0
    %v1462 = vadd.f32 0.0, %v1461
    %v1463 = vpop.f32.mrf.mxu0
    %v1464 = vpop.f32.mrf.mxu0
    %1465 = vdwg.mxu0
    %1466 = vmatprep.subr.bf16.mxu0 %v1344
    %1467 = vmatpush1.bf16.msra.mxu0 %v1343
    %1468 = vmatprep.subr.bf16.mxu0 %v1342
    %1469 = vmatpush1.bf16.msra.mxu0 %v1341
    %1470 = vmatprep.subr.bf16.mxu0 %v1340
    %1471 = vmatpush1.bf16.msra.mxu0 %v1339
    %1472 = vmatprep.subr.bf16.mxu0 %v1338
    %1473 = vmatpush1.bf16.msra.mxu0 %v1337
    %1474 = vmatprep.subr.bf16.mxu0 %v1336
    %1475 = vmatpush1.bf16.msra.mxu0 %v1335
    %1476 = vmatprep.subr.bf16.mxu0 %v1334
    %1477 = vmatpush1.bf16.msra.mxu0 %v1333
    %1478 = vmatprep.subr.bf16.mxu0 %v1332
    %1479 = vmatpush1.bf16.msra.mxu0 %v1331
    %1480 = vmatprep.subr.bf16.mxu0 %v1330
    %1481 = vmatpush1.bf16.msra.mxu0 %v1329
    %1482 = vmatprep.subr.bf16.mxu0 %v1360
    %1483 = vmatpush2.bf16.msra.mxu0 %v1359
    %1484 = vmatprep.subr.bf16.mxu0 %v1358
    %1485 = vmatpush2.bf16.msra.mxu0 %v1357
    %1486 = vmatprep.subr.bf16.mxu0 %v1356
    %1487 = vmatpush2.bf16.msra.mxu0 %v1355
    %1488 = vmatprep.subr.bf16.mxu0 %v1354
    %1489 = vmatpush2.bf16.msra.mxu0 %v1353
    %1490 = vmatprep.subr.bf16.mxu0 %v1352
    %1491 = vmatpush2.bf16.msra.mxu0 %v1351
    %1492 = vmatprep.subr.bf16.mxu0 %v1350
    %1493 = vmatpush2.bf16.msra.mxu0 %v1349
    %1494 = vmatprep.subr.bf16.mxu0 %v1348
    %1495 = vmatpush2.bf16.msra.mxu0 %v1347
    %1496 = vmatprep.subr.bf16.mxu0 %v1346
    %1497 = vmatpush2.bf16.msra.mxu0 %v1345
    %1498 = vmatprep.mubr.bf16.mxu0 %v1040
    %1499 = vmatmul.mubr.bf16.gmra.mxu0 %v1039
    %v1500 = vpop.f32.mrf.mxu0
    %v1501 = vadd.f32 %v1460, %v1500
    %v1502 = vpop.f32.mrf.mxu0
    %v1503 = vadd.f32 %v1462, %v1502
    %v1504 = vpop.f32.mrf.mxu0
    %v1505 = vpop.f32.mrf.mxu0
    %1506 = vdwg.mxu0
    %v1507 = vmax.f32 %v1501, 0.0
    %v1508 = vmax.f32 %v1503, 0.0
    %v1509 = vpack.c.bf16 %v1507, %v1507
    %v1510 = vpack.c.bf16 %v1508, %v1508
    %v1511 = vld [vmem:[%s3] sm:$0xf]
    %v1512 = vld [vmem:[%s3 + $0x4] sm:$0xf]
    %v1513 = vld [vmem:[%s3 + $0x8] sm:$0xf]
    %v1514 = vld [vmem:[%s3 + $0xc] sm:$0xf]
    %v1515 = vld [vmem:[%s3 + $0x10] sm:$0xf]
    %v1516 = vld [vmem:[%s3 + $0x14] sm:$0xf]
    %v1517 = vld [vmem:[%s3 + $0x18] sm:$0xf]
    %v1518 = vld [vmem:[%s3 + $0x1c] sm:$0xf]
    %v1519 = vld [vmem:[%s3 + $0x20] sm:$0xf]
    %v1520 = vld [vmem:[%s3 + $0x24] sm:$0xf]
    %v1521 = vld [vmem:[%s3 + $0x28] sm:$0xf]
    %v1522 = vld [vmem:[%s3 + $0x2c] sm:$0xf]
    %v1523 = vld [vmem:[%s3 + $0x30] sm:$0xf]
    %v1524 = vld [vmem:[%s3 + $0x34] sm:$0xf]
    %v1525 = vld [vmem:[%s3 + $0x38] sm:$0xf]
    %v1526 = vld [vmem:[%s3 + $0x3c] sm:$0xf]
    %v1527 = vld [vmem:[%s3 + $0x40] sm:$0xf]
    %v1528 = vld [vmem:[%s3 + $0x44] sm:$0xf]
    %v1529 = vld [vmem:[%s3 + $0x48] sm:$0xf]
    %v1530 = vld [vmem:[%s3 + $0x4c] sm:$0xf]
    %v1531 = vld [vmem:[%s3 + $0x50] sm:$0xf]
    %v1532 = vld [vmem:[%s3 + $0x54] sm:$0xf]
    %v1533 = vld [vmem:[%s3 + $0x58] sm:$0xf]
    %v1534 = vld [vmem:[%s3 + $0x5c] sm:$0xf]
    %v1535 = vld [vmem:[%s3 + $0x60] sm:$0xf]
    %v1536 = vld [vmem:[%s3 + $0x64] sm:$0xf]
    %v1537 = vld [vmem:[%s3 + $0x68] sm:$0xf]
    %v1538 = vld [vmem:[%s3 + $0x6c] sm:$0xf]
    %v1539 = vld [vmem:[%s3 + $0x70] sm:$0xf]
    %v1540 = vld [vmem:[%s3 + $0x74] sm:$0xf]
    %v1541 = vld [vmem:[%s3 + $0x78] sm:$0xf]
    %v1542 = vld [vmem:[%s3 + $0x7c] sm:$0xf]
    %v1575 = vunpack.c.l.b16 %v1511
    %v1576 = vunpack.c.l.b16 %v1512
    %v1577 = vunpack.c.l.b16 %v1513
    %v1578 = vunpack.c.l.b16 %v1514
    %v1579 = vunpack.c.l.b16 %v1515
    %v1580 = vunpack.c.l.b16 %v1516
    %v1581 = vunpack.c.l.b16 %v1517
    %v1582 = vunpack.c.l.b16 %v1518
    %v1583 = vunpack.c.l.b16 %v1519
    %v1584 = vunpack.c.l.b16 %v1520
    %v1585 = vunpack.c.l.b16 %v1521
    %v1586 = vunpack.c.l.b16 %v1522
    %v1587 = vunpack.c.l.b16 %v1523
    %v1588 = vunpack.c.l.b16 %v1524
    %v1589 = vunpack.c.l.b16 %v1525
    %v1590 = vunpack.c.l.b16 %v1526
    %v1591 = vunpack.c.l.b16 %v1527
    %v1592 = vunpack.c.l.b16 %v1528
    %v1593 = vunpack.c.l.b16 %v1529
    %v1594 = vunpack.c.l.b16 %v1530
    %v1595 = vunpack.c.l.b16 %v1531
    %v1596 = vunpack.c.l.b16 %v1532
    %v1597 = vunpack.c.l.b16 %v1533
    %v1598 = vunpack.c.l.b16 %v1534
    %v1599 = vunpack.c.l.b16 %v1535
    %v1600 = vunpack.c.l.b16 %v1536
    %v1601 = vunpack.c.l.b16 %v1537
    %v1602 = vunpack.c.l.b16 %v1538
    %v1603 = vunpack.c.l.b16 %v1539
    %v1604 = vunpack.c.l.b16 %v1540
    %v1605 = vunpack.c.l.b16 %v1541
    %v1606 = vunpack.c.l.b16 %v1542
    %v1607 = vpack.c.b16 %v1576, %v1575
    %v1608 = vpack.c.b16 %v1578, %v1577
    %v1609 = vpack.c.b16 %v1580, %v1579
    %v1610 = vpack.c.b16 %v1582, %v1581
    %v1611 = vpack.c.b16 %v1584, %v1583
    %v1612 = vpack.c.b16 %v1586, %v1585
    %v1613 = vpack.c.b16 %v1588, %v1587
    %v1614 = vpack.c.b16 %v1590, %v1589
    %v1615 = vpack.c.b16 %v1592, %v1591
    %v1616 = vpack.c.b16 %v1594, %v1593
    %v1617 = vpack.c.b16 %v1596, %v1595
    %v1618 = vpack.c.b16 %v1598, %v1597
    %v1619 = vpack.c.b16 %v1600, %v1599
    %v1620 = vpack.c.b16 %v1602, %v1601
    %v1621 = vpack.c.b16 %v1604, %v1603
    %v1622 = vpack.c.b16 %v1606, %v1605
    %1639 = vmatprep.subr.bf16.mxu0 0
    %1640 = vmatpush1.bf16.msra.mxu0 %v1614
    %1641 = vmatprep.subr.bf16.mxu0 0
    %1642 = vmatpush1.bf16.msra.mxu0 %v1613
    %1643 = vmatprep.subr.bf16.mxu0 0
    %1644 = vmatpush1.bf16.msra.mxu0 %v1612
    %1645 = vmatprep.subr.bf16.mxu0 0
    %1646 = vmatpush1.bf16.msra.mxu0 %v1611
    %1647 = vmatprep.subr.bf16.mxu0 0
    %1648 = vmatpush1.bf16.msra.mxu0 %v1610
    %1649 = vmatprep.subr.bf16.mxu0 0
    %1650 = vmatpush1.bf16.msra.mxu0 %v1609
    %1651 = vmatprep.subr.bf16.mxu0 0
    %1652 = vmatpush1.bf16.msra.mxu0 %v1608
    %1653 = vmatprep.subr.bf16.mxu0 0
    %1654 = vmatpush1.bf16.msra.mxu0 %v1607
    %1655 = vmatprep.subr.bf16.mxu0 0
    %1656 = vmatpush2.bf16.msra.mxu0 %v1622
    %1657 = vmatprep.subr.bf16.mxu0 0
    %1658 = vmatpush2.bf16.msra.mxu0 %v1621
    %1659 = vmatprep.subr.bf16.mxu0 0
    %1660 = vmatpush2.bf16.msra.mxu0 %v1620
    %1661 = vmatprep.subr.bf16.mxu0 0
    %1662 = vmatpush2.bf16.msra.mxu0 %v1619
    %1663 = vmatprep.subr.bf16.mxu0 0
    %1664 = vmatpush2.bf16.msra.mxu0 %v1618
    %1665 = vmatprep.subr.bf16.mxu0 0
    %1666 = vmatpush2.bf16.msra.mxu0 %v1617
    %1667 = vmatprep.subr.bf16.mxu0 0
    %1668 = vmatpush2.bf16.msra.mxu0 %v1616
    %1669 = vmatprep.subr.bf16.mxu0 0
    %1670 = vmatpush2.bf16.msra.mxu0 %v1615
    %1671 = vmatprep.mubr.bf16.mxu0 %v1510
    %1672 = vmatmul.mubr.bf16.gmra.mxu0 %v1509
    %v1673 = vpop.f32.mrf.mxu0
    %v1674 = vadd.f32 0.0, %v1673
    %v1675 = vpop.f32.mrf.mxu0
    %v1676 = vpop.f32.mrf.mxu0
    %v1677 = vpop.f32.mrf.mxu0
    %1678 = vdwg.mxu0
    %v1679 = vmax.f32 %v1674, 0.0
    %v1680 = vpack.c.bf16 %v1679, %v1679
    %v1681 = vld [vmem:[%s4] sm:$0xff]
    %v1682 = vld [vmem:[%s4 + $0x8] sm:$0xff]
    %v1683 = vld [vmem:[%s4 + $0x10] sm:$0xff]
    %v1684 = vld [vmem:[%s4 + $0x18] sm:$0xff]
    %v1685 = vld [vmem:[%s4 + $0x20] sm:$0xff]
    %v1686 = vld [vmem:[%s4 + $0x28] sm:$0xff]
    %v1687 = vld [vmem:[%s4 + $0x30] sm:$0xff]
    %v1688 = vld [vmem:[%s4 + $0x38] sm:$0xff]
    %v1689 = vld [vmem:[%s4 + $0x40] sm:$0xff]
    %v1690 = vld [vmem:[%s4 + $0x48] sm:$0xff]
    %v1691 = vld [vmem:[%s4 + $0x50] sm:$0xff]
    %v1692 = vld [vmem:[%s4 + $0x58] sm:$0xff]
    %v1693 = vld [vmem:[%s4 + $0x60] sm:$0xff]
    %v1694 = vld [vmem:[%s4 + $0x68] sm:$0xff]
    %v1695 = vld [vmem:[%s4 + $0x70] sm:$0xff]
    %v1696 = vld [vmem:[%s4 + $0x78] sm:$0xff]
    %v1713 = vunpack.c.l.b16 %v1681
    %v1714 = vunpack.c.h.b16 %v1681
    %v1715 = vunpack.c.l.b16 %v1682
    %v1716 = vunpack.c.h.b16 %v1682
    %v1717 = vunpack.c.l.b16 %v1683
    %v1718 = vunpack.c.h.b16 %v1683
    %v1719 = vunpack.c.l.b16 %v1684
    %v1720 = vunpack.c.h.b16 %v1684
    %v1721 = vunpack.c.l.b16 %v1685
    %v1722 = vunpack.c.h.b16 %v1685
    %v1723 = vunpack.c.l.b16 %v1686
    %v1724 = vunpack.c.h.b16 %v1686
    %v1725 = vunpack.c.l.b16 %v1687
    %v1726 = vunpack.c.h.b16 %v1687
    %v1727 = vunpack.c.l.b16 %v1688
    %v1728 = vunpack.c.h.b16 %v1688
    %v1729 = vunpack.c.l.b16 %v1689
    %v1730 = vunpack.c.h.b16 %v1689
    %v1731 = vunpack.c.l.b16 %v1690
    %v1732 = vunpack.c.h.b16 %v1690
    %v1733 = vunpack.c.l.b16 %v1691
    %v1734 = vunpack.c.h.b16 %v1691
    %v1735 = vunpack.c.l.b16 %v1692
    %v1736 = vunpack.c.h.b16 %v1692
    %v1737 = vunpack.c.l.b16 %v1693
    %v1738 = vunpack.c.h.b16 %v1693
    %v1739 = vunpack.c.l.b16 %v1694
    %v1740 = vunpack.c.h.b16 %v1694
    %v1741 = vunpack.c.l.b16 %v1695
    %v1742 = vunpack.c.h.b16 %v1695
    %v1743 = vunpack.c.l.b16 %v1696
    %v1744 = vunpack.c.h.b16 %v1696
    %v1745 = vpack.c.b16 %v1715, %v1713
    %v1746 = vpack.c.b16 %v1716, %v1714
    %v1747 = vpack.c.b16 %v1719, %v1717
    %v1748 = vpack.c.b16 %v1720, %v1718
    %v1749 = vpack.c.b16 %v1723, %v1721
    %v1750 = vpack.c.b16 %v1724, %v1722
    %v1751 = vpack.c.b16 %v1727, %v1725
    %v1752 = vpack.c.b16 %v1728, %v1726
    %v1753 = vpack.c.b16 %v1731, %v1729
    %v1754 = vpack.c.b16 %v1732, %v1730
    %v1755 = vpack.c.b16 %v1735, %v1733
    %v1756 = vpack.c.b16 %v1736, %v1734
    %v1757 = vpack.c.b16 %v1739, %v1737
    %v1758 = vpack.c.b16 %v1740, %v1738
    %v1759 = vpack.c.b16 %v1743, %v1741
    %v1760 = vpack.c.b16 %v1744, %v1742
    %1777 = vmatprep.subr.bf16.mxu0 %v1760
    %1778 = vmatpush1.bf16.msra.mxu0 %v1759
    %1779 = vmatprep.subr.bf16.mxu0 %v1758
    %1780 = vmatpush1.bf16.msra.mxu0 %v1757
    %1781 = vmatprep.subr.bf16.mxu0 %v1756
    %1782 = vmatpush1.bf16.msra.mxu0 %v1755
    %1783 = vmatprep.subr.bf16.mxu0 %v1754
    %1784 = vmatpush1.bf16.msra.mxu0 %v1753
    %1785 = vmatprep.subr.bf16.mxu0 %v1752
    %1786 = vmatpush1.bf16.msra.mxu0 %v1751
    %1787 = vmatprep.subr.bf16.mxu0 %v1750
    %1788 = vmatpush1.bf16.msra.mxu0 %v1749
    %1789 = vmatprep.subr.bf16.mxu0 %v1748
    %1790 = vmatpush1.bf16.msra.mxu0 %v1747
    %1791 = vmatprep.subr.bf16.mxu0 %v1746
    %1792 = vmatpush1.bf16.msra.mxu0 %v1745
    %1793 = vmatprep.subr.bf16.mxu0 0
    %1794 = vmatpush2.bf16.msra.mxu0 0
    %1795 = vmatprep.subr.bf16.mxu0 0
    %1796 = vmatpush2.bf16.msra.mxu0 0
    %1797 = vmatprep.subr.bf16.mxu0 0
    %1798 = vmatpush2.bf16.msra.mxu0 0
    %1799 = vmatprep.subr.bf16.mxu0 0
    %1800 = vmatpush2.bf16.msra.mxu0 0
    %1801 = vmatprep.subr.bf16.mxu0 0
    %1802 = vmatpush2.bf16.msra.mxu0 0
    %1803 = vmatprep.subr.bf16.mxu0 0
    %1804 = vmatpush2.bf16.msra.mxu0 0
    %1805 = vmatprep.subr.bf16.mxu0 0
    %1806 = vmatpush2.bf16.msra.mxu0 0
    %1807 = vmatprep.subr.bf16.mxu0 0
    %1808 = vmatpush2.bf16.msra.mxu0 0
    %1809 = vmatprep.mubr.bf16.mxu0 0
    %1810 = vmatmul.mubr.bf16.gmra.mxu0 %v1680
    %v1811 = vpop.f32.mrf.mxu0
    %v1812 = vadd.f32 0.0, %v1811
    %v1813 = vpop.f32.mrf.mxu0
    %v1814 = vadd.f32 0.0, %v1813
    %v1815 = vpop.f32.mrf.mxu0
    %v1816 = vpop.f32.mrf.mxu0
    %1817 = vdwg.mxu0
    %v1818 = vmax.f32 %v1812, 0.0
    %v1819 = vmax.f32 %v1814, 0.0
    %v1820 = vpack.c.bf16 %v1818, %v1818
    %v1821 = vpack.c.bf16 %v1819, %v1819
    %v1822 = vld [vmem:[#allocation6] sm:$0xff]
    %v1823 = vld [vmem:[#allocation6 + $0x8] sm:$0xff]
    %v1824 = vld [vmem:[#allocation6 + $0x10] sm:$0xff]
    %v1825 = vld [vmem:[#allocation6 + $0x18] sm:$0xff]
    %v1826 = vld [vmem:[#allocation6 + $0x20] sm:$0xff]
    %v1827 = vld [vmem:[#allocation6 + $0x28] sm:$0xff]
    %v1828 = vld [vmem:[#allocation6 + $0x30] sm:$0xff]
    %v1829 = vld [vmem:[#allocation6 + $0x38] sm:$0xff]
    %v1830 = vld [vmem:[#allocation6 + $0x40] sm:$0xff]
    %v1831 = vld [vmem:[#allocation6 + $0x48] sm:$0xff]
    %v1832 = vld [vmem:[#allocation6 + $0x50] sm:$0xff]
    %v1833 = vld [vmem:[#allocation6 + $0x58] sm:$0xff]
    %v1834 = vld [vmem:[#allocation6 + $0x60] sm:$0xff]
    %v1835 = vld [vmem:[#allocation6 + $0x68] sm:$0xff]
    %v1836 = vld [vmem:[#allocation6 + $0x70] sm:$0xff]
    %v1837 = vld [vmem:[#allocation6 + $0x78] sm:$0xff]
    %v1838 = vld [vmem:[#allocation6 + $0x80] sm:$0xff]
    %v1839 = vld [vmem:[#allocation6 + $0x88] sm:$0xff]
    %v1840 = vld [vmem:[#allocation6 + $0x90] sm:$0xff]
    %v1841 = vld [vmem:[#allocation6 + $0x98] sm:$0xff]
    %v1842 = vld [vmem:[#allocation6 + $0xa0] sm:$0xff]
    %v1843 = vld [vmem:[#allocation6 + $0xa8] sm:$0xff]
    %v1844 = vld [vmem:[#allocation6 + $0xb0] sm:$0xff]
    %v1845 = vld [vmem:[#allocation6 + $0xb8] sm:$0xff]
    %v1846 = vld [vmem:[#allocation6 + $0xc0] sm:$0xff]
    %v1847 = vld [vmem:[#allocation6 + $0xc8] sm:$0xff]
    %v1848 = vld [vmem:[#allocation6 + $0xd0] sm:$0xff]
    %v1849 = vld [vmem:[#allocation6 + $0xd8] sm:$0xff]
    %v1850 = vld [vmem:[#allocation6 + $0xe0] sm:$0xff]
    %v1851 = vld [vmem:[#allocation6 + $0xe8] sm:$0xff]
    %v1852 = vld [vmem:[#allocation6 + $0xf0] sm:$0xff]
    %v1853 = vld [vmem:[#allocation6 + $0xf8] sm:$0xff]
    %v1854 = vld [vmem:[#allocation6 + $0x100] sm:$0xff]
    %v1855 = vld [vmem:[#allocation6 + $0x108] sm:$0xff]
    %v1856 = vld [vmem:[#allocation6 + $0x110] sm:$0xff]
    %v1857 = vld [vmem:[#allocation6 + $0x118] sm:$0xff]
    %v1858 = vld [vmem:[#allocation6 + $0x120] sm:$0xff]
    %v1859 = vld [vmem:[#allocation6 + $0x128] sm:$0xff]
    %v1860 = vld [vmem:[#allocation6 + $0x130] sm:$0xff]
    %v1861 = vld [vmem:[#allocation6 + $0x138] sm:$0xff]
    %v1862 = vld [vmem:[#allocation6 + $0x140] sm:$0xff]
    %v1863 = vld [vmem:[#allocation6 + $0x148] sm:$0xff]
    %v1864 = vld [vmem:[#allocation6 + $0x150] sm:$0xff]
    %v1865 = vld [vmem:[#allocation6 + $0x158] sm:$0xff]
    %v1866 = vld [vmem:[#allocation6 + $0x160] sm:$0xff]
    %v1867 = vld [vmem:[#allocation6 + $0x168] sm:$0xff]
    %v1868 = vld [vmem:[#allocation6 + $0x170] sm:$0xff]
    %v1869 = vld [vmem:[#allocation6 + $0x178] sm:$0xff]
    %v1870 = vld [vmem:[#allocation6 + $0x180] sm:$0xff]
    %v1871 = vld [vmem:[#allocation6 + $0x188] sm:$0xff]
    %v1872 = vld [vmem:[#allocation6 + $0x190] sm:$0xff]
    %v1873 = vld [vmem:[#allocation6 + $0x198] sm:$0xff]
    %v1874 = vld [vmem:[#allocation6 + $0x1a0] sm:$0xff]
    %v1875 = vld [vmem:[#allocation6 + $0x1a8] sm:$0xff]
    %v1876 = vld [vmem:[#allocation6 + $0x1b0] sm:$0xff]
    %v1877 = vld [vmem:[#allocation6 + $0x1b8] sm:$0xff]
    %v1878 = vld [vmem:[#allocation6 + $0x1c0] sm:$0xff]
    %v1879 = vld [vmem:[#allocation6 + $0x1c8] sm:$0xff]
    %v1880 = vld [vmem:[#allocation6 + $0x1d0] sm:$0xff]
    %v1881 = vld [vmem:[#allocation6 + $0x1d8] sm:$0xff]
    %v1882 = vld [vmem:[#allocation6 + $0x1e0] sm:$0xff]
    %v1883 = vld [vmem:[#allocation6 + $0x1e8] sm:$0xff]
    %v1884 = vld [vmem:[#allocation6 + $0x1f0] sm:$0xff]
    %v1885 = vld [vmem:[#allocation6 + $0x1f8] sm:$0xff]
    %v1950 = vunpack.c.l.b16 %v1822
    %v1951 = vunpack.c.h.b16 %v1822
    %v1952 = vunpack.c.l.b16 %v1823
    %v1953 = vunpack.c.h.b16 %v1823
    %v1954 = vunpack.c.l.b16 %v1824
    %v1955 = vunpack.c.h.b16 %v1824
    %v1956 = vunpack.c.l.b16 %v1825
    %v1957 = vunpack.c.h.b16 %v1825
    %v1958 = vunpack.c.l.b16 %v1826
    %v1959 = vunpack.c.h.b16 %v1826
    %v1960 = vunpack.c.l.b16 %v1827
    %v1961 = vunpack.c.h.b16 %v1827
    %v1962 = vunpack.c.l.b16 %v1828
    %v1963 = vunpack.c.h.b16 %v1828
    %v1964 = vunpack.c.l.b16 %v1829
    %v1965 = vunpack.c.h.b16 %v1829
    %v1966 = vunpack.c.l.b16 %v1830
    %v1967 = vunpack.c.h.b16 %v1830
    %v1968 = vunpack.c.l.b16 %v1831
    %v1969 = vunpack.c.h.b16 %v1831
    %v1970 = vunpack.c.l.b16 %v1832
    %v1971 = vunpack.c.h.b16 %v1832
    %v1972 = vunpack.c.l.b16 %v1833
    %v1973 = vunpack.c.h.b16 %v1833
    %v1974 = vunpack.c.l.b16 %v1834
    %v1975 = vunpack.c.h.b16 %v1834
    %v1976 = vunpack.c.l.b16 %v1835
    %v1977 = vunpack.c.h.b16 %v1835
    %v1978 = vunpack.c.l.b16 %v1836
    %v1979 = vunpack.c.h.b16 %v1836
    %v1980 = vunpack.c.l.b16 %v1837
    %v1981 = vunpack.c.h.b16 %v1837
    %v1982 = vunpack.c.l.b16 %v1838
    %v1983 = vunpack.c.h.b16 %v1838
    %v1984 = vunpack.c.l.b16 %v1839
    %v1985 = vunpack.c.h.b16 %v1839
    %v1986 = vunpack.c.l.b16 %v1840
    %v1987 = vunpack.c.h.b16 %v1840
    %v1988 = vunpack.c.l.b16 %v1841
    %v1989 = vunpack.c.h.b16 %v1841
    %v1990 = vunpack.c.l.b16 %v1842
    %v1991 = vunpack.c.h.b16 %v1842
    %v1992 = vunpack.c.l.b16 %v1843
    %v1993 = vunpack.c.h.b16 %v1843
    %v1994 = vunpack.c.l.b16 %v1844
    %v1995 = vunpack.c.h.b16 %v1844
    %v1996 = vunpack.c.l.b16 %v1845
    %v1997 = vunpack.c.h.b16 %v1845
    %v1998 = vunpack.c.l.b16 %v1846
    %v1999 = vunpack.c.h.b16 %v1846
    %v2000 = vunpack.c.l.b16 %v1847
    %v2001 = vunpack.c.h.b16 %v1847
    %v2002 = vunpack.c.l.b16 %v1848
    %v2003 = vunpack.c.h.b16 %v1848
    %v2004 = vunpack.c.l.b16 %v1849
    %v2005 = vunpack.c.h.b16 %v1849
    %v2006 = vunpack.c.l.b16 %v1850
    %v2007 = vunpack.c.h.b16 %v1850
    %v2008 = vunpack.c.l.b16 %v1851
    %v2009 = vunpack.c.h.b16 %v1851
    %v2010 = vunpack.c.l.b16 %v1852
    %v2011 = vunpack.c.h.b16 %v1852
    %v2012 = vunpack.c.l.b16 %v1853
    %v2013 = vunpack.c.h.b16 %v1853
    %v2014 = vunpack.c.l.b16 %v1854
    %v2015 = vunpack.c.h.b16 %v1854
    %v2016 = vunpack.c.l.b16 %v1855
    %v2017 = vunpack.c.h.b16 %v1855
    %v2018 = vunpack.c.l.b16 %v1856
    %v2019 = vunpack.c.h.b16 %v1856
    %v2020 = vunpack.c.l.b16 %v1857
    %v2021 = vunpack.c.h.b16 %v1857
    %v2022 = vunpack.c.l.b16 %v1858
    %v2023 = vunpack.c.h.b16 %v1858
    %v2024 = vunpack.c.l.b16 %v1859
    %v2025 = vunpack.c.h.b16 %v1859
    %v2026 = vunpack.c.l.b16 %v1860
    %v2027 = vunpack.c.h.b16 %v1860
    %v2028 = vunpack.c.l.b16 %v1861
    %v2029 = vunpack.c.h.b16 %v1861
    %v2030 = vunpack.c.l.b16 %v1862
    %v2031 = vunpack.c.h.b16 %v1862
    %v2032 = vunpack.c.l.b16 %v1863
    %v2033 = vunpack.c.h.b16 %v1863
    %v2034 = vunpack.c.l.b16 %v1864
    %v2035 = vunpack.c.h.b16 %v1864
    %v2036 = vunpack.c.l.b16 %v1865
    %v2037 = vunpack.c.h.b16 %v1865
    %v2038 = vunpack.c.l.b16 %v1866
    %v2039 = vunpack.c.h.b16 %v1866
    %v2040 = vunpack.c.l.b16 %v1867
    %v2041 = vunpack.c.h.b16 %v1867
    %v2042 = vunpack.c.l.b16 %v1868
    %v2043 = vunpack.c.h.b16 %v1868
    %v2044 = vunpack.c.l.b16 %v1869
    %v2045 = vunpack.c.h.b16 %v1869
    %v2046 = vunpack.c.l.b16 %v1870
    %v2047 = vunpack.c.h.b16 %v1870
    %v2048 = vunpack.c.l.b16 %v1871
    %v2049 = vunpack.c.h.b16 %v1871
    %v2050 = vunpack.c.l.b16 %v1872
    %v2051 = vunpack.c.h.b16 %v1872
    %v2052 = vunpack.c.l.b16 %v1873
    %v2053 = vunpack.c.h.b16 %v1873
    %v2054 = vunpack.c.l.b16 %v1874
    %v2055 = vunpack.c.h.b16 %v1874
    %v2056 = vunpack.c.l.b16 %v1875
    %v2057 = vunpack.c.h.b16 %v1875
    %v2058 = vunpack.c.l.b16 %v1876
    %v2059 = vunpack.c.h.b16 %v1876
    %v2060 = vunpack.c.l.b16 %v1877
    %v2061 = vunpack.c.h.b16 %v1877
    %v2062 = vunpack.c.l.b16 %v1878
    %v2063 = vunpack.c.h.b16 %v1878
    %v2064 = vunpack.c.l.b16 %v1879
    %v2065 = vunpack.c.h.b16 %v1879
    %v2066 = vunpack.c.l.b16 %v1880
    %v2067 = vunpack.c.h.b16 %v1880
    %v2068 = vunpack.c.l.b16 %v1881
    %v2069 = vunpack.c.h.b16 %v1881
    %v2070 = vunpack.c.l.b16 %v1882
    %v2071 = vunpack.c.h.b16 %v1882
    %v2072 = vunpack.c.l.b16 %v1883
    %v2073 = vunpack.c.h.b16 %v1883
    %v2074 = vunpack.c.l.b16 %v1884
    %v2075 = vunpack.c.h.b16 %v1884
    %v2076 = vunpack.c.l.b16 %v1885
    %v2077 = vunpack.c.h.b16 %v1885
    %v2078 = vpack.c.b16 %v1954, %v1950
    %v2079 = vpack.c.b16 %v1955, %v1951
    %v2080 = vpack.c.b16 %v1956, %v1952
    %v2081 = vpack.c.b16 %v1957, %v1953
    %v2082 = vpack.c.b16 %v1962, %v1958
    %v2083 = vpack.c.b16 %v1963, %v1959
    %v2084 = vpack.c.b16 %v1964, %v1960
    %v2085 = vpack.c.b16 %v1965, %v1961
    %v2086 = vpack.c.b16 %v1970, %v1966
    %v2087 = vpack.c.b16 %v1971, %v1967
    %v2088 = vpack.c.b16 %v1972, %v1968
    %v2089 = vpack.c.b16 %v1973, %v1969
    %v2090 = vpack.c.b16 %v1978, %v1974
    %v2091 = vpack.c.b16 %v1979, %v1975
    %v2092 = vpack.c.b16 %v1980, %v1976
    %v2093 = vpack.c.b16 %v1981, %v1977
    %v2094 = vpack.c.b16 %v1986, %v1982
    %v2095 = vpack.c.b16 %v1987, %v1983
    %v2096 = vpack.c.b16 %v1988, %v1984
    %v2097 = vpack.c.b16 %v1989, %v1985
    %v2098 = vpack.c.b16 %v1994, %v1990
    %v2099 = vpack.c.b16 %v1995, %v1991
    %v2100 = vpack.c.b16 %v1996, %v1992
    %v2101 = vpack.c.b16 %v1997, %v1993
    %v2102 = vpack.c.b16 %v2002, %v1998
    %v2103 = vpack.c.b16 %v2003, %v1999
    %v2104 = vpack.c.b16 %v2004, %v2000
    %v2105 = vpack.c.b16 %v2005, %v2001
    %v2106 = vpack.c.b16 %v2010, %v2006
    %v2107 = vpack.c.b16 %v2011, %v2007
    %v2108 = vpack.c.b16 %v2012, %v2008
    %v2109 = vpack.c.b16 %v2013, %v2009
    %v2110 = vpack.c.b16 %v2018, %v2014
    %v2111 = vpack.c.b16 %v2019, %v2015
    %v2112 = vpack.c.b16 %v2020, %v2016
    %v2113 = vpack.c.b16 %v2021, %v2017
    %v2114 = vpack.c.b16 %v2026, %v2022
    %v2115 = vpack.c.b16 %v2027, %v2023
    %v2116 = vpack.c.b16 %v2028, %v2024
    %v2117 = vpack.c.b16 %v2029, %v2025
    %v2118 = vpack.c.b16 %v2034, %v2030
    %v2119 = vpack.c.b16 %v2035, %v2031
    %v2120 = vpack.c.b16 %v2036, %v2032
    %v2121 = vpack.c.b16 %v2037, %v2033
    %v2122 = vpack.c.b16 %v2042, %v2038
    %v2123 = vpack.c.b16 %v2043, %v2039
    %v2124 = vpack.c.b16 %v2044, %v2040
    %v2125 = vpack.c.b16 %v2045, %v2041
    %v2126 = vpack.c.b16 %v2050, %v2046
    %v2127 = vpack.c.b16 %v2051, %v2047
    %v2128 = vpack.c.b16 %v2052, %v2048
    %v2129 = vpack.c.b16 %v2053, %v2049
    %v2130 = vpack.c.b16 %v2058, %v2054
    %v2131 = vpack.c.b16 %v2059, %v2055
    %v2132 = vpack.c.b16 %v2060, %v2056
    %v2133 = vpack.c.b16 %v2061, %v2057
    %v2134 = vpack.c.b16 %v2066, %v2062
    %v2135 = vpack.c.b16 %v2067, %v2063
    %v2136 = vpack.c.b16 %v2068, %v2064
    %v2137 = vpack.c.b16 %v2069, %v2065
    %v2138 = vpack.c.b16 %v2074, %v2070
    %v2139 = vpack.c.b16 %v2075, %v2071
    %v2140 = vpack.c.b16 %v2076, %v2072
    %v2141 = vpack.c.b16 %v2077, %v2073
    %2206 = vmatprep.subr.bf16.mxu0 %v2107
    %2207 = vmatpush1.bf16.msra.mxu0 %v2106
    %2208 = vmatprep.subr.bf16.mxu0 %v2103
    %2209 = vmatpush1.bf16.msra.mxu0 %v2102
    %2210 = vmatprep.subr.bf16.mxu0 %v2099
    %2211 = vmatpush1.bf16.msra.mxu0 %v2098
    %2212 = vmatprep.subr.bf16.mxu0 %v2095
    %2213 = vmatpush1.bf16.msra.mxu0 %v2094
    %2214 = vmatprep.subr.bf16.mxu0 %v2091
    %2215 = vmatpush1.bf16.msra.mxu0 %v2090
    %2216 = vmatprep.subr.bf16.mxu0 %v2087
    %2217 = vmatpush1.bf16.msra.mxu0 %v2086
    %2218 = vmatprep.subr.bf16.mxu0 %v2083
    %2219 = vmatpush1.bf16.msra.mxu0 %v2082
    %2220 = vmatprep.subr.bf16.mxu0 %v2079
    %2221 = vmatpush1.bf16.msra.mxu0 %v2078
    %2222 = vmatprep.subr.bf16.mxu0 %v2139
    %2223 = vmatpush2.bf16.msra.mxu0 %v2138
    %2224 = vmatprep.subr.bf16.mxu0 %v2135
    %2225 = vmatpush2.bf16.msra.mxu0 %v2134
    %2226 = vmatprep.subr.bf16.mxu0 %v2131
    %2227 = vmatpush2.bf16.msra.mxu0 %v2130
    %2228 = vmatprep.subr.bf16.mxu0 %v2127
    %2229 = vmatpush2.bf16.msra.mxu0 %v2126
    %2230 = vmatprep.subr.bf16.mxu0 %v2123
    %2231 = vmatpush2.bf16.msra.mxu0 %v2122
    %2232 = vmatprep.subr.bf16.mxu0 %v2119
    %2233 = vmatpush2.bf16.msra.mxu0 %v2118
    %2234 = vmatprep.subr.bf16.mxu0 %v2115
    %2235 = vmatpush2.bf16.msra.mxu0 %v2114
    %2236 = vmatprep.subr.bf16.mxu0 %v2111
    %2237 = vmatpush2.bf16.msra.mxu0 %v2110
    %2238 = vmatprep.mubr.bf16.mxu0 %v1821
    %2239 = vmatmul.mubr.bf16.gmra.mxu0 %v1820
    %v2240 = vpop.f32.mrf.mxu0
    %v2241 = vadd.f32 0.0, %v2240
    %v2242 = vpop.f32.mrf.mxu0
    %v2243 = vadd.f32 0.0, %v2242
    %v2244 = vpop.f32.mrf.mxu0
    %v2245 = vpop.f32.mrf.mxu0
    %2246 = vdwg.mxu0
    %2247 = vmatprep.subr.bf16.mxu0 %v2109
    %2248 = vmatpush1.bf16.msra.mxu0 %v2108
    %2249 = vmatprep.subr.bf16.mxu0 %v2105
    %2250 = vmatpush1.bf16.msra.mxu0 %v2104
    %2251 = vmatprep.subr.bf16.mxu0 %v2101
    %2252 = vmatpush1.bf16.msra.mxu0 %v2100
    %2253 = vmatprep.subr.bf16.mxu0 %v2097
    %2254 = vmatpush1.bf16.msra.mxu0 %v2096
    %2255 = vmatprep.subr.bf16.mxu0 %v2093
    %2256 = vmatpush1.bf16.msra.mxu0 %v2092
    %2257 = vmatprep.subr.bf16.mxu0 %v2089
    %2258 = vmatpush1.bf16.msra.mxu0 %v2088
    %2259 = vmatprep.subr.bf16.mxu0 %v2085
    %2260 = vmatpush1.bf16.msra.mxu0 %v2084
    %2261 = vmatprep.subr.bf16.mxu0 %v2081
    %2262 = vmatpush1.bf16.msra.mxu0 %v2080
    %2263 = vmatprep.subr.bf16.mxu0 %v2141
    %2264 = vmatpush2.bf16.msra.mxu0 %v2140
    %2265 = vmatprep.subr.bf16.mxu0 %v2137
    %2266 = vmatpush2.bf16.msra.mxu0 %v2136
    %2267 = vmatprep.subr.bf16.mxu0 %v2133
    %2268 = vmatpush2.bf16.msra.mxu0 %v2132
    %2269 = vmatprep.subr.bf16.mxu0 %v2129
    %2270 = vmatpush2.bf16.msra.mxu0 %v2128
    %2271 = vmatprep.subr.bf16.mxu0 %v2125
    %2272 = vmatpush2.bf16.msra.mxu0 %v2124
    %2273 = vmatprep.subr.bf16.mxu0 %v2121
    %2274 = vmatpush2.bf16.msra.mxu0 %v2120
    %2275 = vmatprep.subr.bf16.mxu0 %v2117
    %2276 = vmatpush2.bf16.msra.mxu0 %v2116
    %2277 = vmatprep.subr.bf16.mxu0 %v2113
    %2278 = vmatpush2.bf16.msra.mxu0 %v2112
    %2279 = vmatprep.mubr.bf16.mxu0 %v1821
    %2280 = vmatmul.mubr.bf16.gmra.mxu0 %v1820
    %v2281 = vpop.f32.mrf.mxu0
    %v2282 = vadd.f32 0.0, %v2281
    %v2283 = vpop.f32.mrf.mxu0
    %v2284 = vadd.f32 0.0, %v2283
    %v2285 = vpop.f32.mrf.mxu0
    %v2286 = vpop.f32.mrf.mxu0
    %2287 = vdwg.mxu0
    %v2288 = vmax.f32 %v2241, 0.0
    %v2289 = vmax.f32 %v2243, 0.0
    %v2290 = vmax.f32 %v2282, 0.0
    %v2291 = vmax.f32 %v2284, 0.0
    %v2292 = vpack.c.bf16 %v2288, %v2288
    %v2293 = vpack.c.bf16 %v2289, %v2289
    %v2294 = vpack.c.bf16 %v2290, %v2290
    %v2295 = vpack.c.bf16 %v2291, %v2291
    %v2296 = vld [vmem:[#allocation7] sm:$0xff]
    %v2297 = vld [vmem:[#allocation7 + $0x8] sm:$0xff]
    %v2298 = vld [vmem:[#allocation7 + $0x10] sm:$0xff]
    %v2299 = vld [vmem:[#allocation7 + $0x18] sm:$0xff]
    %v2300 = vld [vmem:[#allocation7 + $0x20] sm:$0xff]
    %v2301 = vld [vmem:[#allocation7 + $0x28] sm:$0xff]
    %v2302 = vld [vmem:[#allocation7 + $0x30] sm:$0xff]
    %v2303 = vld [vmem:[#allocation7 + $0x38] sm:$0xff]
    %v2304 = vld [vmem:[#allocation7 + $0x40] sm:$0xff]
    %v2305 = vld [vmem:[#allocation7 + $0x48] sm:$0xff]
    %v2306 = vld [vmem:[#allocation7 + $0x50] sm:$0xff]
    %v2307 = vld [vmem:[#allocation7 + $0x58] sm:$0xff]
    %v2308 = vld [vmem:[#allocation7 + $0x60] sm:$0xff]
    %v2309 = vld [vmem:[#allocation7 + $0x68] sm:$0xff]
    %v2310 = vld [vmem:[#allocation7 + $0x70] sm:$0xff]
    %v2311 = vld [vmem:[#allocation7 + $0x78] sm:$0xff]
    %v2312 = vld [vmem:[#allocation7 + $0x80] sm:$0xff]
    %v2313 = vld [vmem:[#allocation7 + $0x88] sm:$0xff]
    %v2314 = vld [vmem:[#allocation7 + $0x90] sm:$0xff]
    %v2315 = vld [vmem:[#allocation7 + $0x98] sm:$0xff]
    %v2316 = vld [vmem:[#allocation7 + $0xa0] sm:$0xff]
    %v2317 = vld [vmem:[#allocation7 + $0xa8] sm:$0xff]
    %v2318 = vld [vmem:[#allocation7 + $0xb0] sm:$0xff]
    %v2319 = vld [vmem:[#allocation7 + $0xb8] sm:$0xff]
    %v2320 = vld [vmem:[#allocation7 + $0xc0] sm:$0xff]
    %v2321 = vld [vmem:[#allocation7 + $0xc8] sm:$0xff]
    %v2322 = vld [vmem:[#allocation7 + $0xd0] sm:$0xff]
    %v2323 = vld [vmem:[#allocation7 + $0xd8] sm:$0xff]
    %v2324 = vld [vmem:[#allocation7 + $0xe0] sm:$0xff]
    %v2325 = vld [vmem:[#allocation7 + $0xe8] sm:$0xff]
    %v2326 = vld [vmem:[#allocation7 + $0xf0] sm:$0xff]
    %v2327 = vld [vmem:[#allocation7 + $0xf8] sm:$0xff]
    %v2328 = vld [vmem:[#allocation7 + $0x100] sm:$0xff]
    %v2329 = vld [vmem:[#allocation7 + $0x108] sm:$0xff]
    %v2330 = vld [vmem:[#allocation7 + $0x110] sm:$0xff]
    %v2331 = vld [vmem:[#allocation7 + $0x118] sm:$0xff]
    %v2332 = vld [vmem:[#allocation7 + $0x120] sm:$0xff]
    %v2333 = vld [vmem:[#allocation7 + $0x128] sm:$0xff]
    %v2334 = vld [vmem:[#allocation7 + $0x130] sm:$0xff]
    %v2335 = vld [vmem:[#allocation7 + $0x138] sm:$0xff]
    %v2336 = vld [vmem:[#allocation7 + $0x140] sm:$0xff]
    %v2337 = vld [vmem:[#allocation7 + $0x148] sm:$0xff]
    %v2338 = vld [vmem:[#allocation7 + $0x150] sm:$0xff]
    %v2339 = vld [vmem:[#allocation7 + $0x158] sm:$0xff]
    %v2340 = vld [vmem:[#allocation7 + $0x160] sm:$0xff]
    %v2341 = vld [vmem:[#allocation7 + $0x168] sm:$0xff]
    %v2342 = vld [vmem:[#allocation7 + $0x170] sm:$0xff]
    %v2343 = vld [vmem:[#allocation7 + $0x178] sm:$0xff]
    %v2344 = vld [vmem:[#allocation7 + $0x180] sm:$0xff]
    %v2345 = vld [vmem:[#allocation7 + $0x188] sm:$0xff]
    %v2346 = vld [vmem:[#allocation7 + $0x190] sm:$0xff]
    %v2347 = vld [vmem:[#allocation7 + $0x198] sm:$0xff]
    %v2348 = vld [vmem:[#allocation7 + $0x1a0] sm:$0xff]
    %v2349 = vld [vmem:[#allocation7 + $0x1a8] sm:$0xff]
    %v2350 = vld [vmem:[#allocation7 + $0x1b0] sm:$0xff]
    %v2351 = vld [vmem:[#allocation7 + $0x1b8] sm:$0xff]
    %v2352 = vld [vmem:[#allocation7 + $0x1c0] sm:$0xff]
    %v2353 = vld [vmem:[#allocation7 + $0x1c8] sm:$0xff]
    %v2354 = vld [vmem:[#allocation7 + $0x1d0] sm:$0xff]
    %v2355 = vld [vmem:[#allocation7 + $0x1d8] sm:$0xff]
    %v2356 = vld [vmem:[#allocation7 + $0x1e0] sm:$0xff]
    %v2357 = vld [vmem:[#allocation7 + $0x1e8] sm:$0xff]
    %v2358 = vld [vmem:[#allocation7 + $0x1f0] sm:$0xff]
    %v2359 = vld [vmem:[#allocation7 + $0x1f8] sm:$0xff]
    %v2360 = vld [vmem:[#allocation7 + $0x200] sm:$0xff]
    %v2361 = vld [vmem:[#allocation7 + $0x208] sm:$0xff]
    %v2362 = vld [vmem:[#allocation7 + $0x210] sm:$0xff]
    %v2363 = vld [vmem:[#allocation7 + $0x218] sm:$0xff]
    %v2364 = vld [vmem:[#allocation7 + $0x220] sm:$0xff]
    %v2365 = vld [vmem:[#allocation7 + $0x228] sm:$0xff]
    %v2366 = vld [vmem:[#allocation7 + $0x230] sm:$0xff]
    %v2367 = vld [vmem:[#allocation7 + $0x238] sm:$0xff]
    %v2368 = vld [vmem:[#allocation7 + $0x240] sm:$0xff]
    %v2369 = vld [vmem:[#allocation7 + $0x248] sm:$0xff]
    %v2370 = vld [vmem:[#allocation7 + $0x250] sm:$0xff]
    %v2371 = vld [vmem:[#allocation7 + $0x258] sm:$0xff]
    %v2372 = vld [vmem:[#allocation7 + $0x260] sm:$0xff]
    %v2373 = vld [vmem:[#allocation7 + $0x268] sm:$0xff]
    %v2374 = vld [vmem:[#allocation7 + $0x270] sm:$0xff]
    %v2375 = vld [vmem:[#allocation7 + $0x278] sm:$0xff]
    %v2376 = vld [vmem:[#allocation7 + $0x280] sm:$0xff]
    %v2377 = vld [vmem:[#allocation7 + $0x288] sm:$0xff]
    %v2378 = vld [vmem:[#allocation7 + $0x290] sm:$0xff]
    %v2379 = vld [vmem:[#allocation7 + $0x298] sm:$0xff]
    %v2380 = vld [vmem:[#allocation7 + $0x2a0] sm:$0xff]
    %v2381 = vld [vmem:[#allocation7 + $0x2a8] sm:$0xff]
    %v2382 = vld [vmem:[#allocation7 + $0x2b0] sm:$0xff]
    %v2383 = vld [vmem:[#allocation7 + $0x2b8] sm:$0xff]
    %v2384 = vld [vmem:[#allocation7 + $0x2c0] sm:$0xff]
    %v2385 = vld [vmem:[#allocation7 + $0x2c8] sm:$0xff]
    %v2386 = vld [vmem:[#allocation7 + $0x2d0] sm:$0xff]
    %v2387 = vld [vmem:[#allocation7 + $0x2d8] sm:$0xff]
    %v2388 = vld [vmem:[#allocation7 + $0x2e0] sm:$0xff]
    %v2389 = vld [vmem:[#allocation7 + $0x2e8] sm:$0xff]
    %v2390 = vld [vmem:[#allocation7 + $0x2f0] sm:$0xff]
    %v2391 = vld [vmem:[#allocation7 + $0x2f8] sm:$0xff]
    %v2392 = vld [vmem:[#allocation7 + $0x300] sm:$0xff]
    %v2393 = vld [vmem:[#allocation7 + $0x308] sm:$0xff]
    %v2394 = vld [vmem:[#allocation7 + $0x310] sm:$0xff]
    %v2395 = vld [vmem:[#allocation7 + $0x318] sm:$0xff]
    %v2396 = vld [vmem:[#allocation7 + $0x320] sm:$0xff]
    %v2397 = vld [vmem:[#allocation7 + $0x328] sm:$0xff]
    %v2398 = vld [vmem:[#allocation7 + $0x330] sm:$0xff]
    %v2399 = vld [vmem:[#allocation7 + $0x338] sm:$0xff]
    %v2400 = vld [vmem:[#allocation7 + $0x340] sm:$0xff]
    %v2401 = vld [vmem:[#allocation7 + $0x348] sm:$0xff]
    %v2402 = vld [vmem:[#allocation7 + $0x350] sm:$0xff]
    %v2403 = vld [vmem:[#allocation7 + $0x358] sm:$0xff]
    %v2404 = vld [vmem:[#allocation7 + $0x360] sm:$0xff]
    %v2405 = vld [vmem:[#allocation7 + $0x368] sm:$0xff]
    %v2406 = vld [vmem:[#allocation7 + $0x370] sm:$0xff]
    %v2407 = vld [vmem:[#allocation7 + $0x378] sm:$0xff]
    %v2408 = vld [vmem:[#allocation7 + $0x380] sm:$0xff]
    %v2409 = vld [vmem:[#allocation7 + $0x388] sm:$0xff]
    %v2410 = vld [vmem:[#allocation7 + $0x390] sm:$0xff]
    %v2411 = vld [vmem:[#allocation7 + $0x398] sm:$0xff]
    %v2412 = vld [vmem:[#allocation7 + $0x3a0] sm:$0xff]
    %v2413 = vld [vmem:[#allocation7 + $0x3a8] sm:$0xff]
    %v2414 = vld [vmem:[#allocation7 + $0x3b0] sm:$0xff]
    %v2415 = vld [vmem:[#allocation7 + $0x3b8] sm:$0xff]
    %v2416 = vld [vmem:[#allocation7 + $0x3c0] sm:$0xff]
    %v2417 = vld [vmem:[#allocation7 + $0x3c8] sm:$0xff]
    %v2418 = vld [vmem:[#allocation7 + $0x3d0] sm:$0xff]
    %v2419 = vld [vmem:[#allocation7 + $0x3d8] sm:$0xff]
    %v2420 = vld [vmem:[#allocation7 + $0x3e0] sm:$0xff]
    %v2421 = vld [vmem:[#allocation7 + $0x3e8] sm:$0xff]
    %v2422 = vld [vmem:[#allocation7 + $0x3f0] sm:$0xff]
    %v2423 = vld [vmem:[#allocation7 + $0x3f8] sm:$0xff]
    %v2424 = vld [vmem:[%s7] sm:$0xf]
    %v2426 = vlaneseq
    %v2427 = vshrl.u32 %v2426, 7
    %v2428 = vsub.s32 0, %v2427
    %v2429 = vrot.slane %v2424, %v2428
    %v2430 = vlaneseq
    %v2431 = vshrl.u32 %v2430, 7
    %v2432 = vsub.s32 1, %v2431
    %v2433 = vrot.slane %v2424, %v2432
    %v2434 = vlaneseq
    %v2435 = vshrl.u32 %v2434, 7
    %v2436 = vsub.s32 2, %v2435
    %v2437 = vrot.slane %v2424, %v2436
    %v2438 = vlaneseq
    %v2439 = vshrl.u32 %v2438, 7
    %v2440 = vsub.s32 3, %v2439
    %v2441 = vrot.slane %v2424, %v2440
    %v2574 = vunpack.c.l.b16 %v2296
    %v2575 = vunpack.c.h.b16 %v2296
    %v2576 = vunpack.c.l.b16 %v2297
    %v2577 = vunpack.c.h.b16 %v2297
    %v2578 = vunpack.c.l.b16 %v2298
    %v2579 = vunpack.c.h.b16 %v2298
    %v2580 = vunpack.c.l.b16 %v2299
    %v2581 = vunpack.c.h.b16 %v2299
    %v2582 = vunpack.c.l.b16 %v2300
    %v2583 = vunpack.c.h.b16 %v2300
    %v2584 = vunpack.c.l.b16 %v2301
    %v2585 = vunpack.c.h.b16 %v2301
    %v2586 = vunpack.c.l.b16 %v2302
    %v2587 = vunpack.c.h.b16 %v2302
    %v2588 = vunpack.c.l.b16 %v2303
    %v2589 = vunpack.c.h.b16 %v2303
    %v2590 = vunpack.c.l.b16 %v2304
    %v2591 = vunpack.c.h.b16 %v2304
    %v2592 = vunpack.c.l.b16 %v2305
    %v2593 = vunpack.c.h.b16 %v2305
    %v2594 = vunpack.c.l.b16 %v2306
    %v2595 = vunpack.c.h.b16 %v2306
    %v2596 = vunpack.c.l.b16 %v2307
    %v2597 = vunpack.c.h.b16 %v2307
    %v2598 = vunpack.c.l.b16 %v2308
    %v2599 = vunpack.c.h.b16 %v2308
    %v2600 = vunpack.c.l.b16 %v2309
    %v2601 = vunpack.c.h.b16 %v2309
    %v2602 = vunpack.c.l.b16 %v2310
    %v2603 = vunpack.c.h.b16 %v2310
    %v2604 = vunpack.c.l.b16 %v2311
    %v2605 = vunpack.c.h.b16 %v2311
    %v2606 = vunpack.c.l.b16 %v2312
    %v2607 = vunpack.c.h.b16 %v2312
    %v2608 = vunpack.c.l.b16 %v2313
    %v2609 = vunpack.c.h.b16 %v2313
    %v2610 = vunpack.c.l.b16 %v2314
    %v2611 = vunpack.c.h.b16 %v2314
    %v2612 = vunpack.c.l.b16 %v2315
    %v2613 = vunpack.c.h.b16 %v2315
    %v2614 = vunpack.c.l.b16 %v2316
    %v2615 = vunpack.c.h.b16 %v2316
    %v2616 = vunpack.c.l.b16 %v2317
    %v2617 = vunpack.c.h.b16 %v2317
    %v2618 = vunpack.c.l.b16 %v2318
    %v2619 = vunpack.c.h.b16 %v2318
    %v2620 = vunpack.c.l.b16 %v2319
    %v2621 = vunpack.c.h.b16 %v2319
    %v2622 = vunpack.c.l.b16 %v2320
    %v2623 = vunpack.c.h.b16 %v2320
    %v2624 = vunpack.c.l.b16 %v2321
    %v2625 = vunpack.c.h.b16 %v2321
    %v2626 = vunpack.c.l.b16 %v2322
    %v2627 = vunpack.c.h.b16 %v2322
    %v2628 = vunpack.c.l.b16 %v2323
    %v2629 = vunpack.c.h.b16 %v2323
    %v2630 = vunpack.c.l.b16 %v2324
    %v2631 = vunpack.c.h.b16 %v2324
    %v2632 = vunpack.c.l.b16 %v2325
    %v2633 = vunpack.c.h.b16 %v2325
    %v2634 = vunpack.c.l.b16 %v2326
    %v2635 = vunpack.c.h.b16 %v2326
    %v2636 = vunpack.c.l.b16 %v2327
    %v2637 = vunpack.c.h.b16 %v2327
    %v2638 = vunpack.c.l.b16 %v2328
    %v2639 = vunpack.c.h.b16 %v2328
    %v2640 = vunpack.c.l.b16 %v2329
    %v2641 = vunpack.c.h.b16 %v2329
    %v2642 = vunpack.c.l.b16 %v2330
    %v2643 = vunpack.c.h.b16 %v2330
    %v2644 = vunpack.c.l.b16 %v2331
    %v2645 = vunpack.c.h.b16 %v2331
    %v2646 = vunpack.c.l.b16 %v2332
    %v2647 = vunpack.c.h.b16 %v2332
    %v2648 = vunpack.c.l.b16 %v2333
    %v2649 = vunpack.c.h.b16 %v2333
    %v2650 = vunpack.c.l.b16 %v2334
    %v2651 = vunpack.c.h.b16 %v2334
    %v2652 = vunpack.c.l.b16 %v2335
    %v2653 = vunpack.c.h.b16 %v2335
    %v2654 = vunpack.c.l.b16 %v2336
    %v2655 = vunpack.c.h.b16 %v2336
    %v2656 = vunpack.c.l.b16 %v2337
    %v2657 = vunpack.c.h.b16 %v2337
    %v2658 = vunpack.c.l.b16 %v2338
    %v2659 = vunpack.c.h.b16 %v2338
    %v2660 = vunpack.c.l.b16 %v2339
    %v2661 = vunpack.c.h.b16 %v2339
    %v2662 = vunpack.c.l.b16 %v2340
    %v2663 = vunpack.c.h.b16 %v2340
    %v2664 = vunpack.c.l.b16 %v2341
    %v2665 = vunpack.c.h.b16 %v2341
    %v2666 = vunpack.c.l.b16 %v2342
    %v2667 = vunpack.c.h.b16 %v2342
    %v2668 = vunpack.c.l.b16 %v2343
    %v2669 = vunpack.c.h.b16 %v2343
    %v2670 = vunpack.c.l.b16 %v2344
    %v2671 = vunpack.c.h.b16 %v2344
    %v2672 = vunpack.c.l.b16 %v2345
    %v2673 = vunpack.c.h.b16 %v2345
    %v2674 = vunpack.c.l.b16 %v2346
    %v2675 = vunpack.c.h.b16 %v2346
    %v2676 = vunpack.c.l.b16 %v2347
    %v2677 = vunpack.c.h.b16 %v2347
    %v2678 = vunpack.c.l.b16 %v2348
    %v2679 = vunpack.c.h.b16 %v2348
    %v2680 = vunpack.c.l.b16 %v2349
    %v2681 = vunpack.c.h.b16 %v2349
    %v2682 = vunpack.c.l.b16 %v2350
    %v2683 = vunpack.c.h.b16 %v2350
    %v2684 = vunpack.c.l.b16 %v2351
    %v2685 = vunpack.c.h.b16 %v2351
    %v2686 = vunpack.c.l.b16 %v2352
    %v2687 = vunpack.c.h.b16 %v2352
    %v2688 = vunpack.c.l.b16 %v2353
    %v2689 = vunpack.c.h.b16 %v2353
    %v2690 = vunpack.c.l.b16 %v2354
    %v2691 = vunpack.c.h.b16 %v2354
    %v2692 = vunpack.c.l.b16 %v2355
    %v2693 = vunpack.c.h.b16 %v2355
    %v2694 = vunpack.c.l.b16 %v2356
    %v2695 = vunpack.c.h.b16 %v2356
    %v2696 = vunpack.c.l.b16 %v2357
    %v2697 = vunpack.c.h.b16 %v2357
    %v2698 = vunpack.c.l.b16 %v2358
    %v2699 = vunpack.c.h.b16 %v2358
    %v2700 = vunpack.c.l.b16 %v2359
    %v2701 = vunpack.c.h.b16 %v2359
    %v2702 = vunpack.c.l.b16 %v2360
    %v2703 = vunpack.c.h.b16 %v2360
    %v2704 = vunpack.c.l.b16 %v2361
    %v2705 = vunpack.c.h.b16 %v2361
    %v2706 = vunpack.c.l.b16 %v2362
    %v2707 = vunpack.c.h.b16 %v2362
    %v2708 = vunpack.c.l.b16 %v2363
    %v2709 = vunpack.c.h.b16 %v2363
    %v2710 = vunpack.c.l.b16 %v2364
    %v2711 = vunpack.c.h.b16 %v2364
    %v2712 = vunpack.c.l.b16 %v2365
    %v2713 = vunpack.c.h.b16 %v2365
    %v2714 = vunpack.c.l.b16 %v2366
    %v2715 = vunpack.c.h.b16 %v2366
    %v2716 = vunpack.c.l.b16 %v2367
    %v2717 = vunpack.c.h.b16 %v2367
    %v2718 = vunpack.c.l.b16 %v2368
    %v2719 = vunpack.c.h.b16 %v2368
    %v2720 = vunpack.c.l.b16 %v2369
    %v2721 = vunpack.c.h.b16 %v2369
    %v2722 = vunpack.c.l.b16 %v2370
    %v2723 = vunpack.c.h.b16 %v2370
    %v2724 = vunpack.c.l.b16 %v2371
    %v2725 = vunpack.c.h.b16 %v2371
    %v2726 = vunpack.c.l.b16 %v2372
    %v2727 = vunpack.c.h.b16 %v2372
    %v2728 = vunpack.c.l.b16 %v2373
    %v2729 = vunpack.c.h.b16 %v2373
    %v2730 = vunpack.c.l.b16 %v2374
    %v2731 = vunpack.c.h.b16 %v2374
    %v2732 = vunpack.c.l.b16 %v2375
    %v2733 = vunpack.c.h.b16 %v2375
    %v2734 = vunpack.c.l.b16 %v2376
    %v2735 = vunpack.c.h.b16 %v2376
    %v2736 = vunpack.c.l.b16 %v2377
    %v2737 = vunpack.c.h.b16 %v2377
    %v2738 = vunpack.c.l.b16 %v2378
    %v2739 = vunpack.c.h.b16 %v2378
    %v2740 = vunpack.c.l.b16 %v2379
    %v2741 = vunpack.c.h.b16 %v2379
    %v2742 = vunpack.c.l.b16 %v2380
    %v2743 = vunpack.c.h.b16 %v2380
    %v2744 = vunpack.c.l.b16 %v2381
    %v2745 = vunpack.c.h.b16 %v2381
    %v2746 = vunpack.c.l.b16 %v2382
    %v2747 = vunpack.c.h.b16 %v2382
    %v2748 = vunpack.c.l.b16 %v2383
    %v2749 = vunpack.c.h.b16 %v2383
    %v2750 = vunpack.c.l.b16 %v2384
    %v2751 = vunpack.c.h.b16 %v2384
    %v2752 = vunpack.c.l.b16 %v2385
    %v2753 = vunpack.c.h.b16 %v2385
    %v2754 = vunpack.c.l.b16 %v2386
    %v2755 = vunpack.c.h.b16 %v2386
    %v2756 = vunpack.c.l.b16 %v2387
    %v2757 = vunpack.c.h.b16 %v2387
    %v2758 = vunpack.c.l.b16 %v2388
    %v2759 = vunpack.c.h.b16 %v2388
    %v2760 = vunpack.c.l.b16 %v2389
    %v2761 = vunpack.c.h.b16 %v2389
    %v2762 = vunpack.c.l.b16 %v2390
    %v2763 = vunpack.c.h.b16 %v2390
    %v2764 = vunpack.c.l.b16 %v2391
    %v2765 = vunpack.c.h.b16 %v2391
    %v2766 = vunpack.c.l.b16 %v2392
    %v2767 = vunpack.c.h.b16 %v2392
    %v2768 = vunpack.c.l.b16 %v2393
    %v2769 = vunpack.c.h.b16 %v2393
    %v2770 = vunpack.c.l.b16 %v2394
    %v2771 = vunpack.c.h.b16 %v2394
    %v2772 = vunpack.c.l.b16 %v2395
    %v2773 = vunpack.c.h.b16 %v2395
    %v2774 = vunpack.c.l.b16 %v2396
    %v2775 = vunpack.c.h.b16 %v2396
    %v2776 = vunpack.c.l.b16 %v2397
    %v2777 = vunpack.c.h.b16 %v2397
    %v2778 = vunpack.c.l.b16 %v2398
    %v2779 = vunpack.c.h.b16 %v2398
    %v2780 = vunpack.c.l.b16 %v2399
    %v2781 = vunpack.c.h.b16 %v2399
    %v2782 = vunpack.c.l.b16 %v2400
    %v2783 = vunpack.c.h.b16 %v2400
    %v2784 = vunpack.c.l.b16 %v2401
    %v2785 = vunpack.c.h.b16 %v2401
    %v2786 = vunpack.c.l.b16 %v2402
    %v2787 = vunpack.c.h.b16 %v2402
    %v2788 = vunpack.c.l.b16 %v2403
    %v2789 = vunpack.c.h.b16 %v2403
    %v2790 = vunpack.c.l.b16 %v2404
    %v2791 = vunpack.c.h.b16 %v2404
    %v2792 = vunpack.c.l.b16 %v2405
    %v2793 = vunpack.c.h.b16 %v2405
    %v2794 = vunpack.c.l.b16 %v2406
    %v2795 = vunpack.c.h.b16 %v2406
    %v2796 = vunpack.c.l.b16 %v2407
    %v2797 = vunpack.c.h.b16 %v2407
    %v2798 = vunpack.c.l.b16 %v2408
    %v2799 = vunpack.c.h.b16 %v2408
    %v2800 = vunpack.c.l.b16 %v2409
    %v2801 = vunpack.c.h.b16 %v2409
    %v2802 = vunpack.c.l.b16 %v2410
    %v2803 = vunpack.c.h.b16 %v2410
    %v2804 = vunpack.c.l.b16 %v2411
    %v2805 = vunpack.c.h.b16 %v2411
    %v2806 = vunpack.c.l.b16 %v2412
    %v2807 = vunpack.c.h.b16 %v2412
    %v2808 = vunpack.c.l.b16 %v2413
    %v2809 = vunpack.c.h.b16 %v2413
    %v2810 = vunpack.c.l.b16 %v2414
    %v2811 = vunpack.c.h.b16 %v2414
    %v2812 = vunpack.c.l.b16 %v2415
    %v2813 = vunpack.c.h.b16 %v2415
    %v2814 = vunpack.c.l.b16 %v2416
    %v2815 = vunpack.c.h.b16 %v2416
    %v2816 = vunpack.c.l.b16 %v2417
    %v2817 = vunpack.c.h.b16 %v2417
    %v2818 = vunpack.c.l.b16 %v2418
    %v2819 = vunpack.c.h.b16 %v2418
    %v2820 = vunpack.c.l.b16 %v2419
    %v2821 = vunpack.c.h.b16 %v2419
    %v2822 = vunpack.c.l.b16 %v2420
    %v2823 = vunpack.c.h.b16 %v2420
    %v2824 = vunpack.c.l.b16 %v2421
    %v2825 = vunpack.c.h.b16 %v2421
    %v2826 = vunpack.c.l.b16 %v2422
    %v2827 = vunpack.c.h.b16 %v2422
    %v2828 = vunpack.c.l.b16 %v2423
    %v2829 = vunpack.c.h.b16 %v2423
    %v2830 = vpack.c.b16 %v2578, %v2574
    %v2831 = vpack.c.b16 %v2579, %v2575
    %v2832 = vpack.c.b16 %v2580, %v2576
    %v2833 = vpack.c.b16 %v2581, %v2577
    %v2834 = vpack.c.b16 %v2586, %v2582
    %v2835 = vpack.c.b16 %v2587, %v2583
    %v2836 = vpack.c.b16 %v2588, %v2584
    %v2837 = vpack.c.b16 %v2589, %v2585
    %v2838 = vpack.c.b16 %v2594, %v2590
    %v2839 = vpack.c.b16 %v2595, %v2591
    %v2840 = vpack.c.b16 %v2596, %v2592
    %v2841 = vpack.c.b16 %v2597, %v2593
    %v2842 = vpack.c.b16 %v2602, %v2598
    %v2843 = vpack.c.b16 %v2603, %v2599
    %v2844 = vpack.c.b16 %v2604, %v2600
    %v2845 = vpack.c.b16 %v2605, %v2601
    %v2846 = vpack.c.b16 %v2610, %v2606
    %v2847 = vpack.c.b16 %v2611, %v2607
    %v2848 = vpack.c.b16 %v2612, %v2608
    %v2849 = vpack.c.b16 %v2613, %v2609
    %v2850 = vpack.c.b16 %v2618, %v2614
    %v2851 = vpack.c.b16 %v2619, %v2615
    %v2852 = vpack.c.b16 %v2620, %v2616
    %v2853 = vpack.c.b16 %v2621, %v2617
    %v2854 = vpack.c.b16 %v2626, %v2622
    %v2855 = vpack.c.b16 %v2627, %v2623
    %v2856 = vpack.c.b16 %v2628, %v2624
    %v2857 = vpack.c.b16 %v2629, %v2625
    %v2858 = vpack.c.b16 %v2634, %v2630
    %v2859 = vpack.c.b16 %v2635, %v2631
    %v2860 = vpack.c.b16 %v2636, %v2632
    %v2861 = vpack.c.b16 %v2637, %v2633
    %v2862 = vpack.c.b16 %v2642, %v2638
    %v2863 = vpack.c.b16 %v2643, %v2639
    %v2864 = vpack.c.b16 %v2644, %v2640
    %v2865 = vpack.c.b16 %v2645, %v2641
    %v2866 = vpack.c.b16 %v2650, %v2646
    %v2867 = vpack.c.b16 %v2651, %v2647
    %v2868 = vpack.c.b16 %v2652, %v2648
    %v2869 = vpack.c.b16 %v2653, %v2649
    %v2870 = vpack.c.b16 %v2658, %v2654
    %v2871 = vpack.c.b16 %v2659, %v2655
    %v2872 = vpack.c.b16 %v2660, %v2656
    %v2873 = vpack.c.b16 %v2661, %v2657
    %v2874 = vpack.c.b16 %v2666, %v2662
    %v2875 = vpack.c.b16 %v2667, %v2663
    %v2876 = vpack.c.b16 %v2668, %v2664
    %v2877 = vpack.c.b16 %v2669, %v2665
    %v2878 = vpack.c.b16 %v2674, %v2670
    %v2879 = vpack.c.b16 %v2675, %v2671
    %v2880 = vpack.c.b16 %v2676, %v2672
    %v2881 = vpack.c.b16 %v2677, %v2673
    %v2882 = vpack.c.b16 %v2682, %v2678
    %v2883 = vpack.c.b16 %v2683, %v2679
    %v2884 = vpack.c.b16 %v2684, %v2680
    %v2885 = vpack.c.b16 %v2685, %v2681
    %v2886 = vpack.c.b16 %v2690, %v2686
    %v2887 = vpack.c.b16 %v2691, %v2687
    %v2888 = vpack.c.b16 %v2692, %v2688
    %v2889 = vpack.c.b16 %v2693, %v2689
    %v2890 = vpack.c.b16 %v2698, %v2694
    %v2891 = vpack.c.b16 %v2699, %v2695
    %v2892 = vpack.c.b16 %v2700, %v2696
    %v2893 = vpack.c.b16 %v2701, %v2697
    %v2894 = vpack.c.b16 %v2706, %v2702
    %v2895 = vpack.c.b16 %v2707, %v2703
    %v2896 = vpack.c.b16 %v2708, %v2704
    %v2897 = vpack.c.b16 %v2709, %v2705
    %v2898 = vpack.c.b16 %v2714, %v2710
    %v2899 = vpack.c.b16 %v2715, %v2711
    %v2900 = vpack.c.b16 %v2716, %v2712
    %v2901 = vpack.c.b16 %v2717, %v2713
    %v2902 = vpack.c.b16 %v2722, %v2718
    %v2903 = vpack.c.b16 %v2723, %v2719
    %v2904 = vpack.c.b16 %v2724, %v2720
    %v2905 = vpack.c.b16 %v2725, %v2721
    %v2906 = vpack.c.b16 %v2730, %v2726
    %v2907 = vpack.c.b16 %v2731, %v2727
    %v2908 = vpack.c.b16 %v2732, %v2728
    %v2909 = vpack.c.b16 %v2733, %v2729
    %v2910 = vpack.c.b16 %v2738, %v2734
    %v2911 = vpack.c.b16 %v2739, %v2735
    %v2912 = vpack.c.b16 %v2740, %v2736
    %v2913 = vpack.c.b16 %v2741, %v2737
    %v2914 = vpack.c.b16 %v2746, %v2742
    %v2915 = vpack.c.b16 %v2747, %v2743
    %v2916 = vpack.c.b16 %v2748, %v2744
    %v2917 = vpack.c.b16 %v2749, %v2745
    %v2918 = vpack.c.b16 %v2754, %v2750
    %v2919 = vpack.c.b16 %v2755, %v2751
    %v2920 = vpack.c.b16 %v2756, %v2752
    %v2921 = vpack.c.b16 %v2757, %v2753
    %v2922 = vpack.c.b16 %v2762, %v2758
    %v2923 = vpack.c.b16 %v2763, %v2759
    %v2924 = vpack.c.b16 %v2764, %v2760
    %v2925 = vpack.c.b16 %v2765, %v2761
    %v2926 = vpack.c.b16 %v2770, %v2766
    %v2927 = vpack.c.b16 %v2771, %v2767
    %v2928 = vpack.c.b16 %v2772, %v2768
    %v2929 = vpack.c.b16 %v2773, %v2769
    %v2930 = vpack.c.b16 %v2778, %v2774
    %v2931 = vpack.c.b16 %v2779, %v2775
    %v2932 = vpack.c.b16 %v2780, %v2776
    %v2933 = vpack.c.b16 %v2781, %v2777
    %v2934 = vpack.c.b16 %v2786, %v2782
    %v2935 = vpack.c.b16 %v2787, %v2783
    %v2936 = vpack.c.b16 %v2788, %v2784
    %v2937 = vpack.c.b16 %v2789, %v2785
    %v2938 = vpack.c.b16 %v2794, %v2790
    %v2939 = vpack.c.b16 %v2795, %v2791
    %v2940 = vpack.c.b16 %v2796, %v2792
    %v2941 = vpack.c.b16 %v2797, %v2793
    %v2942 = vpack.c.b16 %v2802, %v2798
    %v2943 = vpack.c.b16 %v2803, %v2799
    %v2944 = vpack.c.b16 %v2804, %v2800
    %v2945 = vpack.c.b16 %v2805, %v2801
    %v2946 = vpack.c.b16 %v2810, %v2806
    %v2947 = vpack.c.b16 %v2811, %v2807
    %v2948 = vpack.c.b16 %v2812, %v2808
    %v2949 = vpack.c.b16 %v2813, %v2809
    %v2950 = vpack.c.b16 %v2818, %v2814
    %v2951 = vpack.c.b16 %v2819, %v2815
    %v2952 = vpack.c.b16 %v2820, %v2816
    %v2953 = vpack.c.b16 %v2821, %v2817
    %v2954 = vpack.c.b16 %v2826, %v2822
    %v2955 = vpack.c.b16 %v2827, %v2823
    %v2956 = vpack.c.b16 %v2828, %v2824
    %v2957 = vpack.c.b16 %v2829, %v2825
    %3086 = vmatprep.subr.bf16.mxu0 %v2859
    %3087 = vmatpush1.bf16.msra.mxu0 %v2858
    %3088 = vmatprep.subr.bf16.mxu0 %v2855
    %3089 = vmatpush1.bf16.msra.mxu0 %v2854
    %3090 = vmatprep.subr.bf16.mxu0 %v2851
    %3091 = vmatpush1.bf16.msra.mxu0 %v2850
    %3092 = vmatprep.subr.bf16.mxu0 %v2847
    %3093 = vmatpush1.bf16.msra.mxu0 %v2846
    %3094 = vmatprep.subr.bf16.mxu0 %v2843
    %3095 = vmatpush1.bf16.msra.mxu0 %v2842
    %3096 = vmatprep.subr.bf16.mxu0 %v2839
    %3097 = vmatpush1.bf16.msra.mxu0 %v2838
    %3098 = vmatprep.subr.bf16.mxu0 %v2835
    %3099 = vmatpush1.bf16.msra.mxu0 %v2834
    %3100 = vmatprep.subr.bf16.mxu0 %v2831
    %3101 = vmatpush1.bf16.msra.mxu0 %v2830
    %3102 = vmatprep.subr.bf16.mxu0 %v2891
    %3103 = vmatpush2.bf16.msra.mxu0 %v2890
    %3104 = vmatprep.subr.bf16.mxu0 %v2887
    %3105 = vmatpush2.bf16.msra.mxu0 %v2886
    %3106 = vmatprep.subr.bf16.mxu0 %v2883
    %3107 = vmatpush2.bf16.msra.mxu0 %v2882
    %3108 = vmatprep.subr.bf16.mxu0 %v2879
    %3109 = vmatpush2.bf16.msra.mxu0 %v2878
    %3110 = vmatprep.subr.bf16.mxu0 %v2875
    %3111 = vmatpush2.bf16.msra.mxu0 %v2874
    %3112 = vmatprep.subr.bf16.mxu0 %v2871
    %3113 = vmatpush2.bf16.msra.mxu0 %v2870
    %3114 = vmatprep.subr.bf16.mxu0 %v2867
    %3115 = vmatpush2.bf16.msra.mxu0 %v2866
    %3116 = vmatprep.subr.bf16.mxu0 %v2863
    %3117 = vmatpush2.bf16.msra.mxu0 %v2862
    %3118 = vmatprep.mubr.bf16.mxu0 %v2293
    %3119 = vmatmul.mubr.bf16.gmra.mxu0 %v2292
    %v3120 = vpop.f32.mrf.mxu0
    %v3121 = vadd.f32 %v2429, %v3120
    %v3122 = vpop.f32.mrf.mxu0
    %v3123 = vadd.f32 %v2433, %v3122
    %v3124 = vpop.f32.mrf.mxu0
    %v3125 = vpop.f32.mrf.mxu0
    %3126 = vdwg.mxu0
    %3127 = vmatprep.subr.bf16.mxu0 %v2923
    %3128 = vmatpush1.bf16.msra.mxu0 %v2922
    %3129 = vmatprep.subr.bf16.mxu0 %v2919
    %3130 = vmatpush1.bf16.msra.mxu0 %v2918
    %3131 = vmatprep.subr.bf16.mxu0 %v2915
    %3132 = vmatpush1.bf16.msra.mxu0 %v2914
    %3133 = vmatprep.subr.bf16.mxu0 %v2911
    %3134 = vmatpush1.bf16.msra.mxu0 %v2910
    %3135 = vmatprep.subr.bf16.mxu0 %v2907
    %3136 = vmatpush1.bf16.msra.mxu0 %v2906
    %3137 = vmatprep.subr.bf16.mxu0 %v2903
    %3138 = vmatpush1.bf16.msra.mxu0 %v2902
    %3139 = vmatprep.subr.bf16.mxu0 %v2899
    %3140 = vmatpush1.bf16.msra.mxu0 %v2898
    %3141 = vmatprep.subr.bf16.mxu0 %v2895
    %3142 = vmatpush1.bf16.msra.mxu0 %v2894
    %3143 = vmatprep.subr.bf16.mxu0 %v2955
    %3144 = vmatpush2.bf16.msra.mxu0 %v2954
    %3145 = vmatprep.subr.bf16.mxu0 %v2951
    %3146 = vmatpush2.bf16.msra.mxu0 %v2950
    %3147 = vmatprep.subr.bf16.mxu0 %v2947
    %3148 = vmatpush2.bf16.msra.mxu0 %v2946
    %3149 = vmatprep.subr.bf16.mxu0 %v2943
    %3150 = vmatpush2.bf16.msra.mxu0 %v2942
    %3151 = vmatprep.subr.bf16.mxu0 %v2939
    %3152 = vmatpush2.bf16.msra.mxu0 %v2938
    %3153 = vmatprep.subr.bf16.mxu0 %v2935
    %3154 = vmatpush2.bf16.msra.mxu0 %v2934
    %3155 = vmatprep.subr.bf16.mxu0 %v2931
    %3156 = vmatpush2.bf16.msra.mxu0 %v2930
    %3157 = vmatprep.subr.bf16.mxu0 %v2927
    %3158 = vmatpush2.bf16.msra.mxu0 %v2926
    %3159 = vmatprep.mubr.bf16.mxu0 %v2295
    %3160 = vmatmul.mubr.bf16.gmra.mxu0 %v2294
    %v3161 = vpop.f32.mrf.mxu0
    %v3162 = vadd.f32 %v3121, %v3161
    %v3163 = vpop.f32.mrf.mxu0
    %v3164 = vadd.f32 %v3123, %v3163
    %v3165 = vpop.f32.mrf.mxu0
    %v3166 = vpop.f32.mrf.mxu0
    %3167 = vdwg.mxu0
    %3168 = vmatprep.subr.bf16.mxu0 %v2861
    %3169 = vmatpush1.bf16.msra.mxu0 %v2860
    %3170 = vmatprep.subr.bf16.mxu0 %v2857
    %3171 = vmatpush1.bf16.msra.mxu0 %v2856
    %3172 = vmatprep.subr.bf16.mxu0 %v2853
    %3173 = vmatpush1.bf16.msra.mxu0 %v2852
    %3174 = vmatprep.subr.bf16.mxu0 %v2849
    %3175 = vmatpush1.bf16.msra.mxu0 %v2848
    %3176 = vmatprep.subr.bf16.mxu0 %v2845
    %3177 = vmatpush1.bf16.msra.mxu0 %v2844
    %3178 = vmatprep.subr.bf16.mxu0 %v2841
    %3179 = vmatpush1.bf16.msra.mxu0 %v2840
    %3180 = vmatprep.subr.bf16.mxu0 %v2837
    %3181 = vmatpush1.bf16.msra.mxu0 %v2836
    %3182 = vmatprep.subr.bf16.mxu0 %v2833
    %3183 = vmatpush1.bf16.msra.mxu0 %v2832
    %3184 = vmatprep.subr.bf16.mxu0 %v2893
    %3185 = vmatpush2.bf16.msra.mxu0 %v2892
    %3186 = vmatprep.subr.bf16.mxu0 %v2889
    %3187 = vmatpush2.bf16.msra.mxu0 %v2888
    %3188 = vmatprep.subr.bf16.mxu0 %v2885
    %3189 = vmatpush2.bf16.msra.mxu0 %v2884
    %3190 = vmatprep.subr.bf16.mxu0 %v2881
    %3191 = vmatpush2.bf16.msra.mxu0 %v2880
    %3192 = vmatprep.subr.bf16.mxu0 %v2877
    %3193 = vmatpush2.bf16.msra.mxu0 %v2876
    %3194 = vmatprep.subr.bf16.mxu0 %v2873
    %3195 = vmatpush2.bf16.msra.mxu0 %v2872
    %3196 = vmatprep.subr.bf16.mxu0 %v2869
    %3197 = vmatpush2.bf16.msra.mxu0 %v2868
    %3198 = vmatprep.subr.bf16.mxu0 %v2865
    %3199 = vmatpush2.bf16.msra.mxu0 %v2864
    %3200 = vmatprep.mubr.bf16.mxu0 %v2293
    %3201 = vmatmul.mubr.bf16.gmra.mxu0 %v2292
    %v3202 = vpop.f32.mrf.mxu0
    %v3203 = vadd.f32 %v2437, %v3202
    %v3204 = vpop.f32.mrf.mxu0
    %v3205 = vadd.f32 %v2441, %v3204
    %v3206 = vpop.f32.mrf.mxu0
    %v3207 = vpop.f32.mrf.mxu0
    %3208 = vdwg.mxu0
    %3209 = vmatprep.subr.bf16.mxu0 %v2925
    %3210 = vmatpush1.bf16.msra.mxu0 %v2924
    %3211 = vmatprep.subr.bf16.mxu0 %v2921
    %3212 = vmatpush1.bf16.msra.mxu0 %v2920
    %3213 = vmatprep.subr.bf16.mxu0 %v2917
    %3214 = vmatpush1.bf16.msra.mxu0 %v2916
    %3215 = vmatprep.subr.bf16.mxu0 %v2913
    %3216 = vmatpush1.bf16.msra.mxu0 %v2912
    %3217 = vmatprep.subr.bf16.mxu0 %v2909
    %3218 = vmatpush1.bf16.msra.mxu0 %v2908
    %3219 = vmatprep.subr.bf16.mxu0 %v2905
    %3220 = vmatpush1.bf16.msra.mxu0 %v2904
    %3221 = vmatprep.subr.bf16.mxu0 %v2901
    %3222 = vmatpush1.bf16.msra.mxu0 %v2900
    %3223 = vmatprep.subr.bf16.mxu0 %v2897
    %3224 = vmatpush1.bf16.msra.mxu0 %v2896
    %3225 = vmatprep.subr.bf16.mxu0 %v2957
    %3226 = vmatpush2.bf16.msra.mxu0 %v2956
    %3227 = vmatprep.subr.bf16.mxu0 %v2953
    %3228 = vmatpush2.bf16.msra.mxu0 %v2952
    %3229 = vmatprep.subr.bf16.mxu0 %v2949
    %3230 = vmatpush2.bf16.msra.mxu0 %v2948
    %3231 = vmatprep.subr.bf16.mxu0 %v2945
    %3232 = vmatpush2.bf16.msra.mxu0 %v2944
    %3233 = vmatprep.subr.bf16.mxu0 %v2941
    %3234 = vmatpush2.bf16.msra.mxu0 %v2940
    %3235 = vmatprep.subr.bf16.mxu0 %v2937
    %3236 = vmatpush2.bf16.msra.mxu0 %v2936
    %3237 = vmatprep.subr.bf16.mxu0 %v2933
    %3238 = vmatpush2.bf16.msra.mxu0 %v2932
    %3239 = vmatprep.subr.bf16.mxu0 %v2929
    %3240 = vmatpush2.bf16.msra.mxu0 %v2928
    %3241 = vmatprep.mubr.bf16.mxu0 %v2295
    %3242 = vmatmul.mubr.bf16.gmra.mxu0 %v2294
    %v3243 = vpop.f32.mrf.mxu0
    %v3244 = vadd.f32 %v3203, %v3243
    %v3245 = vpop.f32.mrf.mxu0
    %v3246 = vadd.f32 %v3205, %v3245
    %v3247 = vpop.f32.mrf.mxu0
    %v3248 = vpop.f32.mrf.mxu0
    %3249 = vdwg.mxu0
    %3250 = vst [vmem:[%s8] sm:$0xff] %v3162
    %3251 = vst [vmem:[%s8 + $0x8] sm:$0xff] %v3164
    %3252 = vst [vmem:[%s8 + $0x10] sm:$0xff] %v3244
    %3253 = vst [vmem:[%s8 + $0x18] sm:$0xff] %v3246
    // Predicated region
    $region50: #{mlp_head_forward.1} parent=1 // pred_check
      _
    $region51: #{mlp_head_forward.1} parent=1 // pred_check_branch
      %3255 = sbr.rel (0) target = $region53
    $region52: #{mlp_head_forward.1} parent=1 // pred_region
      _
    $region53: #{mlp_head_forward.1} parent=1 // pred_fallthru
      _
    // Predicated region
    $region54: #{mlp_head_forward.1} parent=1 // pred_check
      _
    $region55: #{mlp_head_forward.1} parent=1 // pred_check_branch
      %3257 = sbr.rel (0) target = $region57
    $region56: #{mlp_head_forward.1} parent=1 // pred_region
      _
    $region57: #{mlp_head_forward.1} parent=1 // pred_fallthru
      _
    %3258 = vsyncpa [#allocation3], 1
    %3259 = vsyncpa [#allocation5], 1
    %3260 = vsyncpa [#allocation8], 1

</llo_original>
